<compile_context>
chip_gen: v6e
topology: v6e:2x2x1
jax: 0.10.0
libtpu: 0.0.40
codegen_flags: <defaults>
</compile_context>

<pallas_src>
import functools

import jax
import jax.numpy as jnp
from jax import lax
from jax.experimental import pallas as pl
from jax.experimental.pallas import tpu as pltpu


# ------------------------------- fused kernel -------------------------------- #

def _tkd_kernel(x_hbm, a_ref, wf_ref, b_ref, o_ref, slab_ref, sem_ref, *,
                Cin, R0, KH, KW, SH, SW, TH, TH_in, WO, WPp):
    """One grid step = one (batch element, TH output rows) tile.

    x_hbm   : ANY/HBM (N, Cin, HP, WPp)   zero-padded input (conv halo + lane pad)
    a_ref   : VMEM (R0, Cin)              stage-1 1x1 weight
    wf_ref  : VMEM (Cout, R0*KH*KW)       folded stage-2+3 weight
    b_ref   : VMEM (Cout, 1)              stage-3 bias
    o_ref   : VMEM (Cout, TH*WO)          output rows, spatial flattened onto lanes
    slab_ref: VMEM scratch (2, Cin, TH_in, WPp)  double-buffered input row slab
    sem_ref : DMA semaphores (2,)
    """
    n = pl.program_id(0)
    h = pl.program_id(1)
    HT = pl.num_programs(1)
    slot = h % 2

    def _slab_copy(row0, sl):
        return pltpu.make_async_copy(
            x_hbm.at[n, :, pl.ds(row0, TH_in), :],   # (Cin, TH_in, WPp) strided HBM read
            slab_ref.at[sl],
            sem_ref.at[sl],
        )

    # Prime the first row slab of this batch element (row axis is sequential per core).
    @pl.when(h == 0)
    def _():
        _slab_copy(0, 0).start()

    # Wait for the slab of the current tile (started either above or as last step's prefetch).
    _slab_copy(h * (TH * SH), slot).wait()

    # Prefetch the next tile's slab; overlaps with this tile's compute.
    @pl.when(h + 1 < HT)
    def _():
        _slab_copy((h + 1) * (TH * SH), 1 - slot).start()

    # ---- stage 1: 1x1 conv (Cin -> R0) on just this tile's rows, one MXU matmul --------
    slab = slab_ref[slot].astype(jnp.float32)                    # (Cin, TH_in, WPp)
    y1 = jnp.dot(a_ref[...], slab.reshape(Cin, TH_in * WPp),
                 preferred_element_type=jnp.float32)             # (R0, TH_in*WPp)
    y1 = y1.reshape(R0, TH_in, WPp)                              # rows on sublanes, W on lanes

    # ---- stages 2+3 fused: im2col patch + ONE lane-dense MXU matmul ---------------------
    # Patch rows ordered (r0, kh, kw) to match the host-side W_fold flattening.
    T = TH * WO
    KK = R0 * KH * KW
    pieces = []
    for r0 in range(R0):
        for kh in range(KH):
            rows = y1[r0, kh:kh + (TH - 1) * SH + 1:SH, :]       # (TH, WPp)
            for kw in range(KW):
                # NOTE(strided cfgs): lane-strided slice only when SW > 1; contiguous otherwise.
                pieces.append(rows[:, kw:kw + (WO - 1) * SW + 1:SW])   # (TH, WO)
    patch = jnp.stack(pieces, axis=0).reshape(KK, T)             # one relayout per tile
    y = jnp.dot(wf_ref[...], patch, preferred_element_type=jnp.float32)   # (Cout, T) on MXU
    y = y + b_ref[...]                                           # (Cout,1) broadcast over lanes
    o_ref[...] = y.astype(o_ref.dtype)                           # lane-dense unmasked store


# ------------------------------- wrapper -------------------------------------- #

def _pick_row_tile(HO, WO, cap):
    """Largest row tile TH dividing HO with TH*WO a multiple of 128 (unmasked, lane-dense
    stores) and TH*WO <= cap.  Fallback: the full extent (always a legal block shape)."""
    aligned = None
    for th in range(1, HO + 1):
        if HO % th:
            continue
        t = th * WO
        if t > cap:
            break
        if t % 128 == 0:
            aligned = th
    return aligned if aligned is not None else HO


def _vmem_limit_bytes(need):
    try:
        cap = int(pltpu.get_tpu_info().vmem_capacity_bytes)
    except Exception:
        cap = 64 * 1024 * 1024            # conservative (v7x physical VMEM)
    want = max(4 * need, 16 * 1024 * 1024)
    return int(min(want, cap * 3 // 4))


def tkd_conv_2d(x, w0, w1, w2, b2, *, stride, padding, row_tile_cap=2048):
    """TKD_Conv_2D forward. I/O is NCHW, exactly like the PyTorch module.

    x  : (N, Cin, H, W)
    w0 : (R0, Cin, 1, 1)   layers[0].weight
    w1 : (R1, R0, KH, KW)  layers[1].weight
    w2 : (Cout, R1, 1, 1)  layers[2].weight
    b2 : (Cout,)           layers[2].bias
    """
    N, Cin, H, W = x.shape
    R0 = w0.shape[0]
    R1, R0_, KH, KW = w1.shape
    assert R0_ == R0
    Cout = w2.shape[0]
    SH, SW = stride
    PH, PW = padding
    HO = (H + 2 * PH - KH) // SH + 1
    WO = (W + 2 * PW - KW) // SW + 1
    Wp = W + 2 * PW
    WPp = ((Wp + 127) // 128) * 128                     # lane-pad width to 128 multiple

    TH = _pick_row_tile(HO, WO, row_tile_cap)
    HT = HO // TH
    TH_in = (TH - 1) * SH + KH
    T = TH * WO
    KK = R0 * KH * KW

    # Host-side: conv zero-padding + lane-padding done once.  Stage-1 (1x1, no bias) of the
    # zero halo is zero, so no in-kernel zero fill is ever needed.
    x_pad = jnp.pad(x, ((0, 0), (0, 0), (PH, PH), (PW, WPp - W - PW)))

    # Host-side weight prep: stage-1 matrix; fold stages 2+3 into one (Cout, R0*KH*KW) matrix.
    a_mat = w0.reshape(R0, Cin).astype(jnp.float32)
    w_fold = jnp.dot(w2.reshape(Cout, R1).astype(jnp.float32),
                     w1.reshape(R1, KK).astype(jnp.float32))
    bias = b2.reshape(Cout, 1).astype(jnp.float32)

    kernel = functools.partial(
        _tkd_kernel, Cin=Cin, R0=R0, KH=KH, KW=KW, SH=SH, SW=SW,
        TH=TH, TH_in=TH_in, WO=WO, WPp=WPp)

    # Per-step VMEM footprint: slab double-buffer + output double-buffer + in-kernel temps.
    itemsize = jnp.dtype(x.dtype).itemsize
    need = (2 * Cin * TH_in * WPp * itemsize
            + 2 * Cout * T * itemsize
            + ((Cin + R0) * TH_in * WPp + (2 * KK + Cout) * T) * 4
            + (1 << 20))

    out = pl.pallas_call(
        kernel,
        out_shape=jax.ShapeDtypeStruct((N, Cout, HO * WO), x.dtype),
        grid=(N, HT),
        in_specs=[
            pl.BlockSpec(memory_space=pl.ANY),                     # x_pad stays in HBM
            pl.BlockSpec((R0, Cin), lambda n, h: (0, 0)),          # stage-1 weight
            pl.BlockSpec((Cout, KK), lambda n, h: (0, 0)),         # folded stage-2+3 weight
            pl.BlockSpec((Cout, 1), lambda n, h: (0, 0)),          # bias
        ],
        out_specs=pl.BlockSpec((None, Cout, T), lambda n, h: (n, 0, h)),
        scratch_shapes=[
            pltpu.VMEM((2, Cin, TH_in, WPp), x.dtype),             # double-buffered row slab
            pltpu.SemaphoreType.DMA((2,)),
        ],
        compiler_params=pltpu.CompilerParams(
            dimension_semantics=("parallel", "arbitrary"),
            vmem_limit_bytes=_vmem_limit_bytes(need)),
    )(x_pad, a_mat, w_fold, bias)

    return out.reshape(N, Cout, HO, WO)


# --------------------------- pure-JAX reference -------------------------------- #

def _ref_forward(x, w0, w1, w2, b2, stride, padding):
    dn = ("NCHW", "OIHW", "NCHW")
    y = lax.conv_general_dilated(x, w0, (1, 1), "VALID", dimension_numbers=dn)
    y = lax.conv_general_dilated(
        y, w1, stride,
        [(padding[0], padding[0]), (padding[1], padding[1])],
        dimension_numbers=dn,
    )
    y = lax.conv_general_dilated(y, w2, (1, 1), "VALID", dimension_numbers=dn)
    return y + b2.reshape(1, -1, 1, 1)


# ----------------------------------- main --------------------------------------- #

if __name__ == "__main__":
    # hyper-params implied by TKD_Conv_2D.__init__
    N, Cin, H, W = 2, 4, 16, 16
    Cout = 8
    rank = (3, 5)
    kernel_size = (3, 3)
    stride = (1, 1)
    padding = (1, 1)

    key = jax.random.PRNGKey(0)
    kx, k0, k1, k2, kb = jax.random.split(key, 5)

    x = jax.random.normal(kx, (N, Cin, H, W), jnp.float32)
    w0 = 0.1 * jax.random.normal(k0, (rank[0], Cin, 1, 1), jnp.float32)
    w1 = 0.1 * jax.random.normal(
        k1, (rank[1], rank[0], kernel_size[0], kernel_size[1]), jnp.float32)
    w2 = 0.1 * jax.random.normal(k2, (Cout, rank[1], 1, 1), jnp.float32)
    b2 = 0.1 * jax.random.normal(kb, (Cout,), jnp.float32)   # orig_layer.bias assumed present

    out = tkd_conv_2d(x, w0, w1, w2, b2, stride=stride, padding=padding)
    out = jax.block_until_ready(out)

    ref = _ref_forward(x, w0, w1, w2, b2, stride, padding)
    assert out.shape == ref.shape == (N, Cout, H, W), (out.shape, ref.shape)
    assert jnp.allclose(out, ref, atol=1e-4, rtol=1e-4), float(jnp.abs(out - ref).max())

    print("KERNEL_OK")
</pallas_src>

<mosaic_0001>
module attributes {stable_mosaic.version = 11 : i64} {
  func.func @_tkd_kernel(%arg0: i32, %arg1: i32, %arg2: memref<2x4x18x128xf32, #tpu.memory_space<any>>, %arg3: memref<3x4xf32, #tpu.memory_space<vmem>>, %arg4: memref<8x27xf32, #tpu.memory_space<vmem>>, %arg5: memref<8x1xf32, #tpu.memory_space<vmem>>, %arg6: memref<1x8x256xf32, #tpu.memory_space<vmem>>, %arg7: memref<2x4x18x128xf32, #tpu.memory_space<vmem>>, %arg8: memref<2x!tpu.dma_semaphore, #tpu.memory_space<semaphore_mem>>) attributes {dimension_semantics = [#tpu.dimension_semantics<parallel>, #tpu.dimension_semantics<arbitrary>], iteration_bounds = array<i64: 2, 1>, scalar_prefetch = 0 : i64, scratch_operands = 2 : i64, tpu.core_type = #tpu.core_type<tc>, window_params = [{}, {pipeline_mode = #tpu.pipeline_mode<synchronous>, transform_indices = @transform_1, window_bounds = array<i64: 3, 4>}, {pipeline_mode = #tpu.pipeline_mode<synchronous>, transform_indices = @transform_2, window_bounds = array<i64: 8, 27>}, {pipeline_mode = #tpu.pipeline_mode<synchronous>, transform_indices = @transform_3, window_bounds = array<i64: 8, 1>}, {transform_indices = @transform_4, window_bounds = array<i64: 1, 8, 256>}]} {
    %c2_i32 = arith.constant 2 : i32
    %c0_i32 = arith.constant 0 : i32
    %0 = arith.cmpi eq, %c2_i32, %c0_i32 : i32
    %c1_i32 = arith.constant 1 : i32
    %1 = arith.select %0, %c1_i32, %c2_i32 : i32
    %2 = arith.remsi %arg1, %1 : i32
    %c0_i32_0 = arith.constant 0 : i32
    %3 = arith.cmpi ne, %2, %c0_i32_0 : i32
    %c0_i32_1 = arith.constant 0 : i32
    %4 = arith.cmpi slt, %2, %c0_i32_1 : i32
    %c0_i32_2 = arith.constant 0 : i32
    %5 = arith.cmpi slt, %1, %c0_i32_2 : i32
    %6 = arith.xori %4, %5 : i1
    %7 = arith.andi %6, %3 : i1
    %8 = arith.addi %2, %1 : i32
    %9 = arith.select %7, %8, %2 : i32
    %c0_i32_3 = arith.constant 0 : i32
    %10 = arith.cmpi eq, %arg1, %c0_i32_3 : i32
    %11 = arith.extui %10 : i1 to i32
    %c0_i32_4 = arith.constant 0 : i32
    %12 = arith.cmpi ne, %11, %c0_i32_4 : i32
    scf.if %12 {
      %c0_i32_25 = arith.constant 0 : i32
      %c0_i32_26 = arith.constant 0 : i32
      %c0_i32_27 = arith.constant 0 : i32
      %c0_i32_28 = arith.constant 0 : i32
      %c0_i32_29 = arith.constant 0 : i32
      %115 = tpu.memref_slice %arg2[%arg0, %c0_i32_27, %c0_i32_28, %c0_i32_29] : memref<2x4x18x128xf32, #tpu.memory_space<any>> -> memref<1x4x18x128xf32, #tpu.memory_space<any>>
      %116 = tpu.memref_squeeze %115 : memref<1x4x18x128xf32, #tpu.memory_space<any>> -> memref<4x18x128xf32, #tpu.memory_space<any>>
      %c0_i32_30 = arith.constant 0 : i32
      %c0_i32_31 = arith.constant 0 : i32
      %c0_i32_32 = arith.constant 0 : i32
      %117 = tpu.memref_slice %arg7[%c0_i32_25, %c0_i32_30, %c0_i32_31, %c0_i32_32] : memref<2x4x18x128xf32, #tpu.memory_space<vmem>> -> memref<1x4x18x128xf32, #tpu.memory_space<vmem>>
      %118 = tpu.memref_squeeze %117 : memref<1x4x18x128xf32, #tpu.memory_space<vmem>> -> memref<4x18x128xf32, #tpu.memory_space<vmem>>
      %119 = tpu.memref_slice %arg8[%c0_i32_26] : memref<2x!tpu.dma_semaphore, #tpu.memory_space<semaphore_mem>> -> memref<1x!tpu.dma_semaphore, #tpu.memory_space<semaphore_mem>>
      %120 = tpu.memref_squeeze %119 : memref<1x!tpu.dma_semaphore, #tpu.memory_space<semaphore_mem>> -> memref<!tpu.dma_semaphore, #tpu.memory_space<semaphore_mem>>
      tpu.enqueue_dma source(%116 : memref<4x18x128xf32, #tpu.memory_space<any>>) target(%118 : memref<4x18x128xf32, #tpu.memory_space<vmem>>) target_semaphore(%120 : memref<!tpu.dma_semaphore, #tpu.memory_space<semaphore_mem>>)
    } else {
    }
    %c16_i32 = arith.constant 16 : i32
    %13 = arith.muli %arg1, %c16_i32 : i32
    %c0_i32_5 = arith.constant 0 : i32
    %c0_i32_6 = arith.constant 0 : i32
    %14 = tpu.memref_slice %arg2[%arg0, %c0_i32_5, %13, %c0_i32_6] : memref<2x4x18x128xf32, #tpu.memory_space<any>> -> memref<1x4x18x128xf32, #tpu.memory_space<any>>
    %15 = tpu.memref_squeeze %14 : memref<1x4x18x128xf32, #tpu.memory_space<any>> -> memref<4x18x128xf32, #tpu.memory_space<any>>
    %c0_i32_7 = arith.constant 0 : i32
    %c0_i32_8 = arith.constant 0 : i32
    %c0_i32_9 = arith.constant 0 : i32
    %16 = tpu.memref_slice %arg7[%9, %c0_i32_7, %c0_i32_8, %c0_i32_9] : memref<2x4x18x128xf32, #tpu.memory_space<vmem>> -> memref<1x4x18x128xf32, #tpu.memory_space<vmem>>
    %17 = tpu.memref_squeeze %16 : memref<1x4x18x128xf32, #tpu.memory_space<vmem>> -> memref<4x18x128xf32, #tpu.memory_space<vmem>>
    %18 = tpu.memref_slice %arg8[%9] : memref<2x!tpu.dma_semaphore, #tpu.memory_space<semaphore_mem>> -> memref<1x!tpu.dma_semaphore, #tpu.memory_space<semaphore_mem>>
    %19 = tpu.memref_squeeze %18 : memref<1x!tpu.dma_semaphore, #tpu.memory_space<semaphore_mem>> -> memref<!tpu.dma_semaphore, #tpu.memory_space<semaphore_mem>>
    tpu.wait_dma2 semaphore(%19 : memref<!tpu.dma_semaphore, #tpu.memory_space<semaphore_mem>>) src(%15 : memref<4x18x128xf32, #tpu.memory_space<any>>) dst(%17 : memref<4x18x128xf32, #tpu.memory_space<vmem>>)
    %c1_i32_10 = arith.constant 1 : i32
    %20 = arith.addi %arg1, %c1_i32_10 : i32
    %c1_i32_11 = arith.constant 1 : i32
    %21 = arith.cmpi slt, %20, %c1_i32_11 : i32
    %22 = arith.extui %21 : i1 to i32
    %c0_i32_12 = arith.constant 0 : i32
    %23 = arith.cmpi ne, %22, %c0_i32_12 : i32
    scf.if %23 {
      %c1_i32_25 = arith.constant 1 : i32
      %115 = arith.addi %arg1, %c1_i32_25 : i32
      %c16_i32_26 = arith.constant 16 : i32
      %116 = arith.muli %115, %c16_i32_26 : i32
      %c1_i32_27 = arith.constant 1 : i32
      %117 = arith.subi %c1_i32_27, %9 : i32
      %c0_i32_28 = arith.constant 0 : i32
      %c0_i32_29 = arith.constant 0 : i32
      %118 = tpu.memref_slice %arg2[%arg0, %c0_i32_28, %116, %c0_i32_29] : memref<2x4x18x128xf32, #tpu.memory_space<any>> -> memref<1x4x18x128xf32, #tpu.memory_space<any>>
      %119 = tpu.memref_squeeze %118 : memref<1x4x18x128xf32, #tpu.memory_space<any>> -> memref<4x18x128xf32, #tpu.memory_space<any>>
      %c0_i32_30 = arith.constant 0 : i32
      %c0_i32_31 = arith.constant 0 : i32
      %c0_i32_32 = arith.constant 0 : i32
      %120 = tpu.memref_slice %arg7[%117, %c0_i32_30, %c0_i32_31, %c0_i32_32] : memref<2x4x18x128xf32, #tpu.memory_space<vmem>> -> memref<1x4x18x128xf32, #tpu.memory_space<vmem>>
      %121 = tpu.memref_squeeze %120 : memref<1x4x18x128xf32, #tpu.memory_space<vmem>> -> memref<4x18x128xf32, #tpu.memory_space<vmem>>
      %122 = tpu.memref_slice %arg8[%117] : memref<2x!tpu.dma_semaphore, #tpu.memory_space<semaphore_mem>> -> memref<1x!tpu.dma_semaphore, #tpu.memory_space<semaphore_mem>>
      %123 = tpu.memref_squeeze %122 : memref<1x!tpu.dma_semaphore, #tpu.memory_space<semaphore_mem>> -> memref<!tpu.dma_semaphore, #tpu.memory_space<semaphore_mem>>
      tpu.enqueue_dma source(%119 : memref<4x18x128xf32, #tpu.memory_space<any>>) target(%121 : memref<4x18x128xf32, #tpu.memory_space<vmem>>) target_semaphore(%123 : memref<!tpu.dma_semaphore, #tpu.memory_space<semaphore_mem>>)
    } else {
    }
    %24 = arith.index_cast %9 : i32 to index
    %c0 = arith.constant 0 : index
    %c0_13 = arith.constant 0 : index
    %c0_14 = arith.constant 0 : index
    %25 = vector.load %arg7[%24, %c0, %c0_13, %c0_14] : memref<2x4x18x128xf32, #tpu.memory_space<vmem>>, vector<1x4x18x128xf32>
    %26 = vector.shape_cast %25 : vector<1x4x18x128xf32> to vector<4x18x128xf32>
    %c0_15 = arith.constant 0 : index
    %c0_16 = arith.constant 0 : index
    %27 = vector.load %arg3[%c0_15, %c0_16] : memref<3x4xf32, #tpu.memory_space<vmem>>, vector<3x4xf32>
    %28 = vector.shape_cast %26 : vector<4x18x128xf32> to vector<4x2304xf32>
    %cst = arith.constant dense<0.000000e+00> : vector<3x2304xf32>
    %29 = tpu.matmul %27, %28, %cst {dimension_numbers = #tpu.dot_dimension_numbers<[1], [0], [0], [1], [0, 0, 1, 1], [], []>} : vector<3x4xf32>, vector<4x2304xf32>, vector<3x2304xf32> -> vector<3x2304xf32>
    %30 = vector.shape_cast %29 : vector<3x2304xf32> to vector<3x18x128xf32>
    %31 = vector.extract_strided_slice %30 {offsets = [0, 0, 0], sizes = [1, 16, 128], strides = [1, 1, 1]} : vector<3x18x128xf32> to vector<1x16x128xf32>
    %32 = vector.shape_cast %31 : vector<1x16x128xf32> to vector<16x128xf32>
    %33 = vector.extract_strided_slice %32 {offsets = [0, 0], sizes = [16, 16], strides = [1, 1]} : vector<16x128xf32> to vector<16x16xf32>
    %34 = vector.extract_strided_slice %32 {offsets = [0, 1], sizes = [16, 16], strides = [1, 1]} : vector<16x128xf32> to vector<16x16xf32>
    %35 = vector.extract_strided_slice %32 {offsets = [0, 2], sizes = [16, 16], strides = [1, 1]} : vector<16x128xf32> to vector<16x16xf32>
    %36 = vector.extract_strided_slice %30 {offsets = [0, 1, 0], sizes = [1, 16, 128], strides = [1, 1, 1]} : vector<3x18x128xf32> to vector<1x16x128xf32>
    %37 = vector.shape_cast %36 : vector<1x16x128xf32> to vector<16x128xf32>
    %38 = vector.extract_strided_slice %37 {offsets = [0, 0], sizes = [16, 16], strides = [1, 1]} : vector<16x128xf32> to vector<16x16xf32>
    %39 = vector.extract_strided_slice %37 {offsets = [0, 1], sizes = [16, 16], strides = [1, 1]} : vector<16x128xf32> to vector<16x16xf32>
    %40 = vector.extract_strided_slice %37 {offsets = [0, 2], sizes = [16, 16], strides = [1, 1]} : vector<16x128xf32> to vector<16x16xf32>
    %41 = vector.extract_strided_slice %30 {offsets = [0, 2, 0], sizes = [1, 16, 128], strides = [1, 1, 1]} : vector<3x18x128xf32> to vector<1x16x128xf32>
    %42 = vector.shape_cast %41 : vector<1x16x128xf32> to vector<16x128xf32>
    %43 = vector.extract_strided_slice %42 {offsets = [0, 0], sizes = [16, 16], strides = [1, 1]} : vector<16x128xf32> to vector<16x16xf32>
    %44 = vector.extract_strided_slice %42 {offsets = [0, 1], sizes = [16, 16], strides = [1, 1]} : vector<16x128xf32> to vector<16x16xf32>
    %45 = vector.extract_strided_slice %42 {offsets = [0, 2], sizes = [16, 16], strides = [1, 1]} : vector<16x128xf32> to vector<16x16xf32>
    %46 = vector.extract_strided_slice %30 {offsets = [1, 0, 0], sizes = [1, 16, 128], strides = [1, 1, 1]} : vector<3x18x128xf32> to vector<1x16x128xf32>
    %47 = vector.shape_cast %46 : vector<1x16x128xf32> to vector<16x128xf32>
    %48 = vector.extract_strided_slice %47 {offsets = [0, 0], sizes = [16, 16], strides = [1, 1]} : vector<16x128xf32> to vector<16x16xf32>
    %49 = vector.extract_strided_slice %47 {offsets = [0, 1], sizes = [16, 16], strides = [1, 1]} : vector<16x128xf32> to vector<16x16xf32>
    %50 = vector.extract_strided_slice %47 {offsets = [0, 2], sizes = [16, 16], strides = [1, 1]} : vector<16x128xf32> to vector<16x16xf32>
    %51 = vector.extract_strided_slice %30 {offsets = [1, 1, 0], sizes = [1, 16, 128], strides = [1, 1, 1]} : vector<3x18x128xf32> to vector<1x16x128xf32>
    %52 = vector.shape_cast %51 : vector<1x16x128xf32> to vector<16x128xf32>
    %53 = vector.extract_strided_slice %52 {offsets = [0, 0], sizes = [16, 16], strides = [1, 1]} : vector<16x128xf32> to vector<16x16xf32>
    %54 = vector.extract_strided_slice %52 {offsets = [0, 1], sizes = [16, 16], strides = [1, 1]} : vector<16x128xf32> to vector<16x16xf32>
    %55 = vector.extract_strided_slice %52 {offsets = [0, 2], sizes = [16, 16], strides = [1, 1]} : vector<16x128xf32> to vector<16x16xf32>
    %56 = vector.extract_strided_slice %30 {offsets = [1, 2, 0], sizes = [1, 16, 128], strides = [1, 1, 1]} : vector<3x18x128xf32> to vector<1x16x128xf32>
    %57 = vector.shape_cast %56 : vector<1x16x128xf32> to vector<16x128xf32>
    %58 = vector.extract_strided_slice %57 {offsets = [0, 0], sizes = [16, 16], strides = [1, 1]} : vector<16x128xf32> to vector<16x16xf32>
    %59 = vector.extract_strided_slice %57 {offsets = [0, 1], sizes = [16, 16], strides = [1, 1]} : vector<16x128xf32> to vector<16x16xf32>
    %60 = vector.extract_strided_slice %57 {offsets = [0, 2], sizes = [16, 16], strides = [1, 1]} : vector<16x128xf32> to vector<16x16xf32>
    %61 = vector.extract_strided_slice %30 {offsets = [2, 0, 0], sizes = [1, 16, 128], strides = [1, 1, 1]} : vector<3x18x128xf32> to vector<1x16x128xf32>
    %62 = vector.shape_cast %61 : vector<1x16x128xf32> to vector<16x128xf32>
    %63 = vector.extract_strided_slice %62 {offsets = [0, 0], sizes = [16, 16], strides = [1, 1]} : vector<16x128xf32> to vector<16x16xf32>
    %64 = vector.extract_strided_slice %62 {offsets = [0, 1], sizes = [16, 16], strides = [1, 1]} : vector<16x128xf32> to vector<16x16xf32>
    %65 = vector.extract_strided_slice %62 {offsets = [0, 2], sizes = [16, 16], strides = [1, 1]} : vector<16x128xf32> to vector<16x16xf32>
    %66 = vector.extract_strided_slice %30 {offsets = [2, 1, 0], sizes = [1, 16, 128], strides = [1, 1, 1]} : vector<3x18x128xf32> to vector<1x16x128xf32>
    %67 = vector.shape_cast %66 : vector<1x16x128xf32> to vector<16x128xf32>
    %68 = vector.extract_strided_slice %67 {offsets = [0, 0], sizes = [16, 16], strides = [1, 1]} : vector<16x128xf32> to vector<16x16xf32>
    %69 = vector.extract_strided_slice %67 {offsets = [0, 1], sizes = [16, 16], strides = [1, 1]} : vector<16x128xf32> to vector<16x16xf32>
    %70 = vector.extract_strided_slice %67 {offsets = [0, 2], sizes = [16, 16], strides = [1, 1]} : vector<16x128xf32> to vector<16x16xf32>
    %71 = vector.extract_strided_slice %30 {offsets = [2, 2, 0], sizes = [1, 16, 128], strides = [1, 1, 1]} : vector<3x18x128xf32> to vector<1x16x128xf32>
    %72 = vector.shape_cast %71 : vector<1x16x128xf32> to vector<16x128xf32>
    %73 = vector.extract_strided_slice %72 {offsets = [0, 0], sizes = [16, 16], strides = [1, 1]} : vector<16x128xf32> to vector<16x16xf32>
    %74 = vector.extract_strided_slice %72 {offsets = [0, 1], sizes = [16, 16], strides = [1, 1]} : vector<16x128xf32> to vector<16x16xf32>
    %75 = vector.extract_strided_slice %72 {offsets = [0, 2], sizes = [16, 16], strides = [1, 1]} : vector<16x128xf32> to vector<16x16xf32>
    %76 = vector.shape_cast %33 : vector<16x16xf32> to vector<1x16x16xf32>
    %77 = vector.shape_cast %34 : vector<16x16xf32> to vector<1x16x16xf32>
    %78 = vector.shape_cast %35 : vector<16x16xf32> to vector<1x16x16xf32>
    %79 = vector.shape_cast %38 : vector<16x16xf32> to vector<1x16x16xf32>
    %80 = vector.shape_cast %39 : vector<16x16xf32> to vector<1x16x16xf32>
    %81 = vector.shape_cast %40 : vector<16x16xf32> to vector<1x16x16xf32>
    %82 = vector.shape_cast %43 : vector<16x16xf32> to vector<1x16x16xf32>
    %83 = vector.shape_cast %44 : vector<16x16xf32> to vector<1x16x16xf32>
    %84 = vector.shape_cast %45 : vector<16x16xf32> to vector<1x16x16xf32>
    %85 = vector.shape_cast %48 : vector<16x16xf32> to vector<1x16x16xf32>
    %86 = vector.shape_cast %49 : vector<16x16xf32> to vector<1x16x16xf32>
    %87 = vector.shape_cast %50 : vector<16x16xf32> to vector<1x16x16xf32>
    %88 = vector.shape_cast %53 : vector<16x16xf32> to vector<1x16x16xf32>
    %89 = vector.shape_cast %54 : vector<16x16xf32> to vector<1x16x16xf32>
    %90 = vector.shape_cast %55 : vector<16x16xf32> to vector<1x16x16xf32>
    %91 = vector.shape_cast %58 : vector<16x16xf32> to vector<1x16x16xf32>
    %92 = vector.shape_cast %59 : vector<16x16xf32> to vector<1x16x16xf32>
    %93 = vector.shape_cast %60 : vector<16x16xf32> to vector<1x16x16xf32>
    %94 = vector.shape_cast %63 : vector<16x16xf32> to vector<1x16x16xf32>
    %95 = vector.shape_cast %64 : vector<16x16xf32> to vector<1x16x16xf32>
    %96 = vector.shape_cast %65 : vector<16x16xf32> to vector<1x16x16xf32>
    %97 = vector.shape_cast %68 : vector<16x16xf32> to vector<1x16x16xf32>
    %98 = vector.shape_cast %69 : vector<16x16xf32> to vector<1x16x16xf32>
    %99 = vector.shape_cast %70 : vector<16x16xf32> to vector<1x16x16xf32>
    %100 = vector.shape_cast %73 : vector<16x16xf32> to vector<1x16x16xf32>
    %101 = vector.shape_cast %74 : vector<16x16xf32> to vector<1x16x16xf32>
    %102 = vector.shape_cast %75 : vector<16x16xf32> to vector<1x16x16xf32>
    %103 = tpu.concatenate %76, %77, %78, %79, %80, %81, %82, %83, %84, %85, %86, %87, %88, %89, %90, %91 in 0 : vector<1x16x16xf32>, vector<1x16x16xf32>, vector<1x16x16xf32>, vector<1x16x16xf32>, vector<1x16x16xf32>, vector<1x16x16xf32>, vector<1x16x16xf32>, vector<1x16x16xf32>, vector<1x16x16xf32>, vector<1x16x16xf32>, vector<1x16x16xf32>, vector<1x16x16xf32>, vector<1x16x16xf32>, vector<1x16x16xf32>, vector<1x16x16xf32>, vector<1x16x16xf32> -> vector<16x16x16xf32>
    %104 = tpu.concatenate %92, %93, %94, %95, %96, %97, %98, %99, %100, %101, %102 in 0 : vector<1x16x16xf32>, vector<1x16x16xf32>, vector<1x16x16xf32>, vector<1x16x16xf32>, vector<1x16x16xf32>, vector<1x16x16xf32>, vector<1x16x16xf32>, vector<1x16x16xf32>, vector<1x16x16xf32>, vector<1x16x16xf32>, vector<1x16x16xf32> -> vector<11x16x16xf32>
    %105 = tpu.concatenate %103, %104 in 0 : vector<16x16x16xf32>, vector<11x16x16xf32> -> vector<27x16x16xf32>
    %106 = vector.shape_cast %105 : vector<27x16x16xf32> to vector<27x256xf32>
    %c0_17 = arith.constant 0 : index
    %c0_18 = arith.constant 0 : index
    %107 = vector.load %arg4[%c0_17, %c0_18] : memref<8x27xf32, #tpu.memory_space<vmem>>, vector<8x27xf32>
    %cst_19 = arith.constant dense<0.000000e+00> : vector<8x256xf32>
    %108 = tpu.matmul %107, %106, %cst_19 {dimension_numbers = #tpu.dot_dimension_numbers<[1], [0], [0], [1], [0, 0, 1, 1], [], []>} : vector<8x27xf32>, vector<27x256xf32>, vector<8x256xf32> -> vector<8x256xf32>
    %c0_20 = arith.constant 0 : index
    %c0_21 = arith.constant 0 : index
    %109 = vector.load %arg5[%c0_20, %c0_21] : memref<8x1xf32, #tpu.memory_space<vmem>>, vector<8x1xf32>
    %110 = vector.broadcast %109 : vector<8x1xf32> to vector<8x256xf32>
    %111 = arith.addf %108, %110 : vector<8x256xf32>
    %c0_22 = arith.constant 0 : index
    %c0_23 = arith.constant 0 : index
    %c0_24 = arith.constant 0 : index
    %112 = vector.load %arg6[%c0_22, %c0_23, %c0_24] : memref<1x8x256xf32, #tpu.memory_space<vmem>>, vector<1x8x256xf32>
    %113 = vector.shape_cast %112 : vector<1x8x256xf32> to vector<8x256xf32>
    %114 = vector.shape_cast %111 : vector<8x256xf32> to vector<1x8x256xf32>
    tpu.vector_store %arg6[%c0_22, %c0_23, %c0_24], %114 {strides = array<i32>} : memref<1x8x256xf32, #tpu.memory_space<vmem>>, vector<1x8x256xf32>,
    return
  }
  func.func @transform_1(%arg0: i32, %arg1: i32) -> (i32, i32) {
    %c0_i32 = arith.constant 0 : i32
    %c0_i32_0 = arith.constant 0 : i32
    %c0_i32_1 = arith.constant 0 : i32
    return %c0_i32, %c0_i32_0 : i32, i32
  }
  func.func @transform_2(%arg0: i32, %arg1: i32) -> (i32, i32) {
    %c0_i32 = arith.constant 0 : i32
    %c0_i32_0 = arith.constant 0 : i32
    %c0_i32_1 = arith.constant 0 : i32
    return %c0_i32, %c0_i32_0 : i32, i32
  }
  func.func @transform_3(%arg0: i32, %arg1: i32) -> (i32, i32) {
    %c0_i32 = arith.constant 0 : i32
    %c0_i32_0 = arith.constant 0 : i32
    %c0_i32_1 = arith.constant 0 : i32
    return %c0_i32, %c0_i32_0 : i32, i32
  }
  func.func @transform_4(%arg0: i32, %arg1: i32) -> (i32, i32, i32) {
    %c0_i32 = arith.constant 0 : i32
    %c0_i32_0 = arith.constant 0 : i32
    return %arg0, %c0_i32, %arg1 : i32, i32, i32
  }
}

</mosaic_0001>

<llo_original>
// kernel: tpu_custom_call.1
$region0: #{tpu_custom_call.1}
  #allocation0 [shape = 'u32[]', space=smem, size = 0x4, offset = 0x4, fixed_abs, tag = 'smem constant byte address 0x4 - core index']
  #allocation1 [shape = 'u32[144,128]{1,0:T(1,128)}', space=vmem, size = 0x12000, scoped, tag = 'internal scratch']
  #allocation2 [shape = 'f32[2,4,18,128]{3,2,1,0:T(8,128)}', space=vmem, size = 0x18000, scoped, tag = 'scratch operand']
  #allocation3 [shape = 's32[2]{0}', space=sflag, size = 0x8, scoped, tag = 'scratch operand']
  #allocation6 [shape = 's32[]', space=sflag, size = 0x4, offset = 0, fixed_abs, tag = 'sflag constant byte address 0x0 - dummy sync flag']
  #allocation7 [shape = 's32[]', space=sflag, size = 0x4, offset = 0, fixed_abs, tag = 'sflag constant byte address 0x0 - dummy sync flag']
  %s0 = inlined_call_operand.vmem [shape: f32[2,4,18,128], index: 0, kind: input, shape index: {}]
  %s1 = inlined_call_operand.vmem [shape: f32[3,4], index: 1, kind: input, shape index: {}]
  %s2 = inlined_call_operand.vmem [shape: f32[8,27], index: 2, kind: input, shape index: {}]
  %s3 = inlined_call_operand.vmem [shape: f32[8,1], index: 3, kind: input, shape index: {}]
  %s4 = inlined_call_operand.hbm [shape: f32[2,8,256], index: 4, kind: output, shape index: {}]
  %s5 = sld [smem:[#allocation0]]
  $region127: #{tpu_custom_call.1} parent=0
    _
  %s7 = ssub.s32 1, %s5
  %s8 = scalar_select 0, %s7, %s5
  $region1: #{tpu_custom_call.1} parent=0
    #allocation4 [shape = 'u8[16384]{0}', space=vmem, size = 0x4000, scoped, tag = 'output window, operand 0']
    #allocation5 [shape = 's32[2]{0}', space=sflag, size = 0x8, scoped, tag = 'scoped memory for tpu_custom_call.1']
    %9 = vsyncpa [#allocation5], 0
    %s10 = scalar_lea.sflag [#allocation5], 1
    %11 = vsyncpa %s10, 0
    loop: start=0, step=1, limit=4
    $region2: #{tpu_custom_call.1} parent=1 // loop_pre_header
      _
    $region3: #{tpu_custom_call.1} parent=1 // loop_header
      %s13 = sphi 0, %s17
      %p14 = scmp.ge.s32.totalorder %s13, 4
      %s20 = sphi 0, %s32
      %s21 = sphi 0, %s28
      %s22 = sphi 0, %s20
      %s23 = sphi 0, %s21
      %s24 = sphi 0, %s22
      %s25 = sphi 0, %s23
      %s33 = sphi 0, %s33
      %s35 = sphi 0, %s33
      %s36 = sphi 0, %s35
      %s50 = sphi 0, %s36
      %s54 = sphi 0, %s54
      %s56 = sphi 0, %s54
      %s57 = sphi 0, %s56
      %s71 = sphi 0, %s57
      %s75 = sphi 0, %s75
      %s77 = sphi 0, %s75
      %s78 = sphi 0, %s77
      %s92 = sphi 0, %s78
      %s100 = sphi 0, %s102
      %s103 = sphi 0, %s100
      %s104 = sphi 0, %s103
      %s120 = sphi 0, %s104
    $region4: #{tpu_custom_call.1} parent=1 // loop_header_branch
      %16 = sbr.rel (%p14) target = $region8
    $region5: #{tpu_custom_call.1} parent=1 // loop_body
      %s18 = ssub.s32 %s13, 1
      %s19 = ssub.s32 %s13, 2
      %s26 = sadd.s32 1, %s21
      %p27 = scmp.ge.s32.totalorder %s26, 1
      %s28 = scalar_select %p27, 0, %s26
      %s29 = sadd.s32 1, %s20
      %s30 = scalar_select %p27, %s29, %s20
      %p31 = scmp.ge.s32.totalorder %s30, 2
      %s32 = scalar_select %p31, 0, %s30
      %s34 = sadd.s32 %s33, 1
      %p37 = scmp.eq.s32.totalorder %s13, 1
      %p38 = scmp.ne.s32.totalorder %s33, %s35
      %p39 = scmp.eq.s32.totalorder %s13, 0
      %p40 = por %p38, %p39
      %p41 = scmp.ne.s32.totalorder %s33, %s35
      %p42 = scmp.eq.s32.totalorder %s18, 1
      %p43 = por %p41, %p42
      %p44 = scmp.ne.s32.totalorder %s35, %s36
      %p45 = scmp.eq.s32.totalorder %s18, 0
      %p46 = por %p44, %p45
      %p47 = scmp.ne.s32.totalorder %s35, %s36
      %p48 = scmp.eq.s32.totalorder %s19, 1
      %p49 = por %p47, %p48
      %p51 = scmp.ne.s32.totalorder %s36, %s50
      %p52 = scmp.eq.s32.totalorder %s19, 0
      %p53 = por %p51, %p52
      %s55 = sadd.s32 %s54, 1
      %p58 = scmp.eq.s32.totalorder %s13, 1
      %p59 = scmp.ne.s32.totalorder %s54, %s56
      %p60 = scmp.eq.s32.totalorder %s13, 0
      %p61 = por %p59, %p60
      %p62 = scmp.ne.s32.totalorder %s54, %s56
      %p63 = scmp.eq.s32.totalorder %s18, 1
      %p64 = por %p62, %p63
      %p65 = scmp.ne.s32.totalorder %s56, %s57
      %p66 = scmp.eq.s32.totalorder %s18, 0
      %p67 = por %p65, %p66
      %p68 = scmp.ne.s32.totalorder %s56, %s57
      %p69 = scmp.eq.s32.totalorder %s19, 1
      %p70 = por %p68, %p69
      %p72 = scmp.ne.s32.totalorder %s57, %s71
      %p73 = scmp.eq.s32.totalorder %s19, 0
      %p74 = por %p72, %p73
      %s76 = sadd.s32 %s75, 1
      %p79 = scmp.eq.s32.totalorder %s13, 1
      %p80 = scmp.ne.s32.totalorder %s75, %s77
      %p81 = scmp.eq.s32.totalorder %s13, 0
      %p82 = por %p80, %p81
      %p83 = scmp.ne.s32.totalorder %s75, %s77
      %p84 = scmp.eq.s32.totalorder %s18, 1
      %p85 = por %p83, %p84
      %p86 = scmp.ne.s32.totalorder %s77, %s78
      %p87 = scmp.eq.s32.totalorder %s18, 0
      %p88 = por %p86, %p87
      %p89 = scmp.ne.s32.totalorder %s77, %s78
      %p90 = scmp.eq.s32.totalorder %s19, 1
      %p91 = por %p89, %p90
      %p93 = scmp.ne.s32.totalorder %s78, %s92
      %p94 = scmp.eq.s32.totalorder %s19, 0
      %p95 = por %p93, %p94
      %s96 = ssub.s32 %s20, %s32
      %s97 = ssub.s32 %s21, %s28
      %s98 = sor.u32 %s96, %s97
      %p99 = scmp.eq.s32.totalorder %s98, 0
      %s101 = sadd.s32 %s100, 1
      %s102 = scalar_select %p99, %s100, %s101
      %p105 = pneg %p99
      %p106 = scmp.eq.s32.totalorder %s13, 1
      %p107 = por %p105, %p106
      %p108 = scmp.ne.s32.totalorder %s100, %s103
      %p109 = scmp.eq.s32.totalorder %s13, 0
      %p110 = por %p108, %p109
      %p111 = scmp.ne.s32.totalorder %s100, %s103
      %p112 = scmp.eq.s32.totalorder %s18, 1
      %p113 = por %p111, %p112
      %p114 = scmp.ne.s32.totalorder %s103, %s104
      %p115 = scmp.eq.s32.totalorder %s18, 0
      %p116 = por %p114, %p115
      %p117 = scmp.ne.s32.totalorder %s103, %s104
      %p118 = scmp.eq.s32.totalorder %s19, 1
      %p119 = por %p117, %p118
      %p121 = scmp.ne.s32.totalorder %s104, %s120
      %p122 = scmp.eq.s32.totalorder %s19, 0
      %p123 = por %p121, %p122
      %p124 = scmp.le.s32.totalorder 1, %s13
      %p125 = scmp.lt.s32.totalorder %s13, 3
      %p126 = pnand %p124, %p125
      %p127 = pneg %p126
      // Predicated region
      $region9: #{tpu_custom_call.1} parent=5 // pred_check
        _
      $region10: #{tpu_custom_call.1} parent=5 // pred_check_branch
        %129 = sbr.rel (%p126) target = $region12
      $region11: #{tpu_custom_call.1} parent=5 // pred_region
        %s130 = ssub.s32 %s13, 1
        // Predicated region
        $region13: #{tpu_custom_call.1} parent=11 // pred_check
          %p131 = pneg %p46
        $region14: #{tpu_custom_call.1} parent=11 // pred_check_branch
          %133 = sbr.rel (%p131) target = $region16
        $region15: #{tpu_custom_call.1} parent=11 // pred_region
          _
        $region16: #{tpu_custom_call.1} parent=11 // pred_fallthru
          _
        // Predicated region
        $region17: #{tpu_custom_call.1} parent=11 // pred_check
          %p134 = pneg %p67
        $region18: #{tpu_custom_call.1} parent=11 // pred_check_branch
          %136 = sbr.rel (%p134) target = $region20
        $region19: #{tpu_custom_call.1} parent=11 // pred_region
          _
        $region20: #{tpu_custom_call.1} parent=11 // pred_fallthru
          _
        // Predicated region
        $region21: #{tpu_custom_call.1} parent=11 // pred_check
          %p137 = pneg %p88
        $region22: #{tpu_custom_call.1} parent=11 // pred_check_branch
          %139 = sbr.rel (%p137) target = $region24
        $region23: #{tpu_custom_call.1} parent=11 // pred_region
          _
        $region24: #{tpu_custom_call.1} parent=11 // pred_fallthru
          _
      $region12: #{tpu_custom_call.1} parent=5 // pred_fallthru
        _
      %p140 = scmp.lt.s32.totalorder %s13, 2
      // Predicated region
      $region25: #{tpu_custom_call.1} parent=5 // pred_check
        %p141 = pneg %p140
      $region26: #{tpu_custom_call.1} parent=5 // pred_check_branch
        %143 = sbr.rel (%p141) target = $region28
      $region27: #{tpu_custom_call.1} parent=5 // pred_region
        _
      $region28: #{tpu_custom_call.1} parent=5 // pred_fallthru
        _
      %p144 = scmp.le.s32.totalorder 1, %s13
      %p145 = scmp.lt.s32.totalorder %s13, 3
      %p146 = pnand %p144, %p145
      %p147 = pneg %p146
      // Predicated region
      $region29: #{tpu_custom_call.1} parent=5 // pred_check
        _
      $region30: #{tpu_custom_call.1} parent=5 // pred_check_branch
        %149 = sbr.rel (%p146) target = $region32
      $region31: #{tpu_custom_call.1} parent=5 // pred_region
        %s150 = ssub.s32 %s13, 1
        %p151 = pneg %p46
        %p152 = pneg %p43
        %p153 = pneg %p67
        %p154 = pneg %p64
        %p155 = pneg %p88
        %p156 = pneg %p85
        %p157 = pneg %p116
        %p158 = pneg %p113
        %s159 = sand.u32 %s103, 1
        %s160 = scalar_lea.sflag [#allocation5], %s159
        %s161 = sand.u32 %s103, 1
        %s162 = smul.addr %s161, 16
        %s163 = scalar_lea.vmem [#allocation4], %s162
        %s164 = smul.u32 2, %s23
        %p165 = scmp.lt.s32.totalorder %s23, 0
        %s166 = ssub.s32 0, %s23
        %s167 = scalar_select %p165, %s166, %s23
        %s168 = sand.u32 %s167, 1
        %s169 = ssub.s32 0, %s168
        %s170 = scalar_select %p165, %s169, %s168
        %p171 = scmp.ne.s32.totalorder %s170, 0
        %p172 = scmp.lt.s32.totalorder %s170, 0
        %p173 = pnand %p172, %p171
        %p174 = pneg %p173
        %s175 = sadd.s32 %s170, 2
        %s176 = scalar_select %p174, %s175, %s170
        %p177 = scmp.eq.s32.totalorder %s23, 0
        // Predicated region
        $region33: #{tpu_custom_call.1} parent=31 // pred_check
          %p178 = pneg %p177
        $region34: #{tpu_custom_call.1} parent=31 // pred_check_branch
          %180 = sbr.rel (%p178) target = $region36
        $region35: #{tpu_custom_call.1} parent=31 // pred_region
          %s181 = smul.u32 %s22, 96
          %s182 = scalar_lea.vmem %s0, %s181
          %p184 = scmp.lt.u32.totalorder 18, 8
          %p185 = pneg %p184
          // Predicated region
          $region37: #{tpu_custom_call.1} parent=35 // pred_check
            _
          $region38: #{tpu_custom_call.1} parent=35 // pred_check_branch
            %187 = sbr.rel (%p184) target = $region40
          $region39: #{tpu_custom_call.1} parent=35 // pred_region
            %s209 = sand.u32 18, 7
            %p210 = scmp.eq.s32.totalorder %s209, 0
            %p211 = pneg %p210
            // Predicated region
            $region52: #{tpu_custom_call.1} parent=39 // pred_check
              _
            $region53: #{tpu_custom_call.1} parent=39 // pred_check_branch
              %213 = sbr.rel (%p210) target = $region55
            $region54: #{tpu_custom_call.1} parent=39 // pred_region
              %s214 = sand.u32 18, 7
              %s215 = ssub.s32 18, %s214
              %s216 = scalar_lea.vmem %s182, %s215
              %s217 = ssub.s32 18, %s214
              %s218 = scalar_lea.vmem [#allocation2], %s217
              loop: start=0, step=1, limit=1
              $region56: #{tpu_custom_call.1} parent=54 // loop_pre_header
                _
              $region57: #{tpu_custom_call.1} parent=54 // loop_header
                %s220 = sphi 0, %s224
                %p221 = scmp.ge.s32.totalorder %s220, 1
                %s225 = sphi %s182, %s182
                %s226 = sphi [#allocation2], [#allocation2]
              $region58: #{tpu_custom_call.1} parent=54 // loop_header_branch
                %223 = sbr.rel (%p221) target = $region62
              $region59: #{tpu_custom_call.1} parent=54 // loop_body
                %v227 = vld [vmem:[%s225] sm:$0xff]
                %228 = vst [vmem:[%s226] sm:$0xff] %v227
                %v229 = vld [vmem:[%s225 + $0x8] sm:$0xff]
                %230 = vst [vmem:[%s226 + $0x8] sm:$0xff] %v229
                %v231 = vld [vmem:[%s225 + $0x18] sm:$0xff]
                %232 = vst [vmem:[%s226 + $0x18] sm:$0xff] %v231
                %v233 = vld [vmem:[%s225 + $0x20] sm:$0xff]
                %234 = vst [vmem:[%s226 + $0x20] sm:$0xff] %v233
                %v235 = vld [vmem:[%s225 + $0x30] sm:$0xff]
                %236 = vst [vmem:[%s226 + $0x30] sm:$0xff] %v235
                %v237 = vld [vmem:[%s225 + $0x38] sm:$0xff]
                %238 = vst [vmem:[%s226 + $0x38] sm:$0xff] %v237
                %v239 = vld [vmem:[%s225 + $0x48] sm:$0xff]
                %240 = vst [vmem:[%s226 + $0x48] sm:$0xff] %v239
                %v241 = vld [vmem:[%s225 + $0x50] sm:$0xff]
                %242 = vst [vmem:[%s226 + $0x50] sm:$0xff] %v241
              $region60: #{tpu_custom_call.1} parent=54 // loop_footer
                %s224 = sadd.s32 1, %s220
              $region61: #{tpu_custom_call.1} parent=54 // loop_footer_branch
                %219 = sbr.rel target = $region57
              $region62: #{tpu_custom_call.1} parent=54 // loop_exit
                _
              %s243 = sshll.u32 1, %s214
              %s244 = ssub.s32 %s243, 1
              loop: start=0, step=1, limit=1
              $region63: #{tpu_custom_call.1} parent=54 // loop_pre_header
                _
              $region64: #{tpu_custom_call.1} parent=54 // loop_header
                %s246 = sphi 0, %s250
                %p247 = scmp.ge.s32.totalorder %s246, 1
                %s251 = sphi %s216, %s216
                %s252 = sphi %s218, %s218
              $region65: #{tpu_custom_call.1} parent=54 // loop_header_branch
                %249 = sbr.rel (%p247) target = $region69
              $region66: #{tpu_custom_call.1} parent=54 // loop_body
                %v253 = vld [vmem:[%s251] sm:%s244]
                %254 = vst [vmem:[%s252] sm:%s244] %v253
                %v255 = vld [vmem:[%s251 + $0x18] sm:%s244]
                %256 = vst [vmem:[%s252 + $0x18] sm:%s244] %v255
                %v257 = vld [vmem:[%s251 + $0x30] sm:%s244]
                %258 = vst [vmem:[%s252 + $0x30] sm:%s244] %v257
                %v259 = vld [vmem:[%s251 + $0x48] sm:%s244]
                %260 = vst [vmem:[%s252 + $0x48] sm:%s244] %v259
              $region67: #{tpu_custom_call.1} parent=54 // loop_footer
                %s250 = sadd.s32 1, %s246
              $region68: #{tpu_custom_call.1} parent=54 // loop_footer_branch
                %245 = sbr.rel target = $region64
              $region69: #{tpu_custom_call.1} parent=54 // loop_exit
                _
            $region55: #{tpu_custom_call.1} parent=39 // pred_fallthru
              _
          $region40: #{tpu_custom_call.1} parent=35 // pred_fallthru
            _
          // Predicated region
          $region41: #{tpu_custom_call.1} parent=35 // pred_check
            %p188 = pneg %p184
          $region42: #{tpu_custom_call.1} parent=35 // pred_check_branch
            %190 = sbr.rel (%p188) target = $region44
          $region43: #{tpu_custom_call.1} parent=35 // pred_region
            %s191 = sshll.u32 1, 18
            %s192 = ssub.s32 %s191, 1
            loop: start=0, step=1, limit=1
            $region45: #{tpu_custom_call.1} parent=43 // loop_pre_header
              _
            $region46: #{tpu_custom_call.1} parent=43 // loop_header
              %s194 = sphi 0, %s198
              %p195 = scmp.ge.s32.totalorder %s194, 1
              %s199 = sphi %s182, %s182
              %s200 = sphi [#allocation2], [#allocation2]
            $region47: #{tpu_custom_call.1} parent=43 // loop_header_branch
              %197 = sbr.rel (%p195) target = $region51
            $region48: #{tpu_custom_call.1} parent=43 // loop_body
              %v201 = vld [vmem:[%s199] sm:%s192]
              %202 = vst [vmem:[%s200] sm:%s192] %v201
              %v203 = vld [vmem:[%s199 + $0x18] sm:%s192]
              %204 = vst [vmem:[%s200 + $0x18] sm:%s192] %v203
              %v205 = vld [vmem:[%s199 + $0x30] sm:%s192]
              %206 = vst [vmem:[%s200 + $0x30] sm:%s192] %v205
              %v207 = vld [vmem:[%s199 + $0x48] sm:%s192]
              %208 = vst [vmem:[%s200 + $0x48] sm:%s192] %v207
            $region49: #{tpu_custom_call.1} parent=43 // loop_footer
              %s198 = sadd.s32 1, %s194
            $region50: #{tpu_custom_call.1} parent=43 // loop_footer_branch
              %193 = sbr.rel target = $region46
            $region51: #{tpu_custom_call.1} parent=43 // loop_exit
              _
          $region44: #{tpu_custom_call.1} parent=35 // pred_fallthru
            _
          // Predicated region
          $region70: #{tpu_custom_call.1} parent=35 // pred_check
            _
          $region71: #{tpu_custom_call.1} parent=35 // pred_check_branch
            %263 = sbr.rel (0) target = $region73
          $region72: #{tpu_custom_call.1} parent=35 // pred_region
            %264 = vsyncadd [#allocation3], 1152
          $region73: #{tpu_custom_call.1} parent=35 // pred_fallthru
            _
        $region36: #{tpu_custom_call.1} parent=31 // pred_fallthru
          _
        %s265 = smul.u32 %s176, 96
        %s266 = scalar_lea.vmem [#allocation2], %s265
        %s267 = scalar_lea.sflag [#allocation3], %s176
        %s268 = smul.u32 4, 18
        %s269 = smul.u32 %s268, 1
        %s270 = sshll.u32 %s269, 4
        %271 = dma.done %s267, %s270
        %s272 = sadd.s32 %s23, 1
        %p273 = scmp.lt.s32.totalorder %s272, 1
        // Predicated region
        $region74: #{tpu_custom_call.1} parent=31 // pred_check
          %p274 = pneg %p273
        $region75: #{tpu_custom_call.1} parent=31 // pred_check_branch
          %276 = sbr.rel (%p274) target = $region77
        $region76: #{tpu_custom_call.1} parent=31 // pred_region
          %s277 = smul.u32 %s272, 16
          %s278 = ssub.s32 1, %s176
          %s279 = smul.u32 %s22, 96
          %s280 = sadd.s32 %s277, %s279
          %s281 = scalar_lea.vmem %s0, %s280
          %s282 = smul.u32 %s278, 96
          %s283 = scalar_lea.vmem [#allocation2], %s282
          %s284 = scalar_lea.sflag [#allocation3], %s278
          %p286 = scmp.lt.u32.totalorder 18, 8
          %p287 = pneg %p286
          // Predicated region
          $region78: #{tpu_custom_call.1} parent=76 // pred_check
            _
          $region79: #{tpu_custom_call.1} parent=76 // pred_check_branch
            %289 = sbr.rel (%p286) target = $region81
          $region80: #{tpu_custom_call.1} parent=76 // pred_region
            %s311 = sand.u32 18, 7
            %p312 = scmp.eq.s32.totalorder %s311, 0
            %p313 = pneg %p312
            // Predicated region
            $region93: #{tpu_custom_call.1} parent=80 // pred_check
              _
            $region94: #{tpu_custom_call.1} parent=80 // pred_check_branch
              %315 = sbr.rel (%p312) target = $region96
            $region95: #{tpu_custom_call.1} parent=80 // pred_region
              %s316 = sand.u32 18, 7
              %s317 = ssub.s32 18, %s316
              %s318 = scalar_lea.vmem %s281, %s317
              %s319 = ssub.s32 18, %s316
              %s320 = scalar_lea.vmem %s283, %s319 [#allocation2]
              loop: start=0, step=1, limit=1
              $region97: #{tpu_custom_call.1} parent=95 // loop_pre_header
                _
              $region98: #{tpu_custom_call.1} parent=95 // loop_header
                %s322 = sphi 0, %s326
                %p323 = scmp.ge.s32.totalorder %s322, 1
                %s327 = sphi %s281, %s281
                %s328 = sphi %s283, %s283
              $region99: #{tpu_custom_call.1} parent=95 // loop_header_branch
                %325 = sbr.rel (%p323) target = $region103
              $region100: #{tpu_custom_call.1} parent=95 // loop_body
                %v329 = vld [vmem:[%s327] sm:$0xff]
                %330 = vst [vmem:[%s328] sm:$0xff] %v329
                %v331 = vld [vmem:[%s327 + $0x8] sm:$0xff]
                %332 = vst [vmem:[%s328 + $0x8] sm:$0xff] %v331
                %v333 = vld [vmem:[%s327 + $0x18] sm:$0xff]
                %334 = vst [vmem:[%s328 + $0x18] sm:$0xff] %v333
                %v335 = vld [vmem:[%s327 + $0x20] sm:$0xff]
                %336 = vst [vmem:[%s328 + $0x20] sm:$0xff] %v335
                %v337 = vld [vmem:[%s327 + $0x30] sm:$0xff]
                %338 = vst [vmem:[%s328 + $0x30] sm:$0xff] %v337
                %v339 = vld [vmem:[%s327 + $0x38] sm:$0xff]
                %340 = vst [vmem:[%s328 + $0x38] sm:$0xff] %v339
                %v341 = vld [vmem:[%s327 + $0x48] sm:$0xff]
                %342 = vst [vmem:[%s328 + $0x48] sm:$0xff] %v341
                %v343 = vld [vmem:[%s327 + $0x50] sm:$0xff]
                %344 = vst [vmem:[%s328 + $0x50] sm:$0xff] %v343
              $region101: #{tpu_custom_call.1} parent=95 // loop_footer
                %s326 = sadd.s32 1, %s322
              $region102: #{tpu_custom_call.1} parent=95 // loop_footer_branch
                %321 = sbr.rel target = $region98
              $region103: #{tpu_custom_call.1} parent=95 // loop_exit
                _
              %s345 = sshll.u32 1, %s316
              %s346 = ssub.s32 %s345, 1
              loop: start=0, step=1, limit=1
              $region104: #{tpu_custom_call.1} parent=95 // loop_pre_header
                _
              $region105: #{tpu_custom_call.1} parent=95 // loop_header
                %s348 = sphi 0, %s352
                %p349 = scmp.ge.s32.totalorder %s348, 1
                %s353 = sphi %s318, %s318
                %s354 = sphi %s320, %s320
              $region106: #{tpu_custom_call.1} parent=95 // loop_header_branch
                %351 = sbr.rel (%p349) target = $region110
              $region107: #{tpu_custom_call.1} parent=95 // loop_body
                %v355 = vld [vmem:[%s353] sm:%s346]
                %356 = vst [vmem:[%s354] sm:%s346] %v355
                %v357 = vld [vmem:[%s353 + $0x18] sm:%s346]
                %358 = vst [vmem:[%s354 + $0x18] sm:%s346] %v357
                %v359 = vld [vmem:[%s353 + $0x30] sm:%s346]
                %360 = vst [vmem:[%s354 + $0x30] sm:%s346] %v359
                %v361 = vld [vmem:[%s353 + $0x48] sm:%s346]
                %362 = vst [vmem:[%s354 + $0x48] sm:%s346] %v361
              $region108: #{tpu_custom_call.1} parent=95 // loop_footer
                %s352 = sadd.s32 1, %s348
              $region109: #{tpu_custom_call.1} parent=95 // loop_footer_branch
                %347 = sbr.rel target = $region105
              $region110: #{tpu_custom_call.1} parent=95 // loop_exit
                _
            $region96: #{tpu_custom_call.1} parent=80 // pred_fallthru
              _
          $region81: #{tpu_custom_call.1} parent=76 // pred_fallthru
            _
          // Predicated region
          $region82: #{tpu_custom_call.1} parent=76 // pred_check
            %p290 = pneg %p286
          $region83: #{tpu_custom_call.1} parent=76 // pred_check_branch
            %292 = sbr.rel (%p290) target = $region85
          $region84: #{tpu_custom_call.1} parent=76 // pred_region
            %s293 = sshll.u32 1, 18
            %s294 = ssub.s32 %s293, 1
            loop: start=0, step=1, limit=1
            $region86: #{tpu_custom_call.1} parent=84 // loop_pre_header
              _
            $region87: #{tpu_custom_call.1} parent=84 // loop_header
              %s296 = sphi 0, %s300
              %p297 = scmp.ge.s32.totalorder %s296, 1
              %s301 = sphi %s281, %s281
              %s302 = sphi %s283, %s283
            $region88: #{tpu_custom_call.1} parent=84 // loop_header_branch
              %299 = sbr.rel (%p297) target = $region92
            $region89: #{tpu_custom_call.1} parent=84 // loop_body
              %v303 = vld [vmem:[%s301] sm:%s294]
              %304 = vst [vmem:[%s302] sm:%s294] %v303
              %v305 = vld [vmem:[%s301 + $0x18] sm:%s294]
              %306 = vst [vmem:[%s302 + $0x18] sm:%s294] %v305
              %v307 = vld [vmem:[%s301 + $0x30] sm:%s294]
              %308 = vst [vmem:[%s302 + $0x30] sm:%s294] %v307
              %v309 = vld [vmem:[%s301 + $0x48] sm:%s294]
              %310 = vst [vmem:[%s302 + $0x48] sm:%s294] %v309
            $region90: #{tpu_custom_call.1} parent=84 // loop_footer
              %s300 = sadd.s32 1, %s296
            $region91: #{tpu_custom_call.1} parent=84 // loop_footer_branch
              %295 = sbr.rel target = $region87
            $region92: #{tpu_custom_call.1} parent=84 // loop_exit
              _
          $region85: #{tpu_custom_call.1} parent=76 // pred_fallthru
            _
          // Predicated region
          $region111: #{tpu_custom_call.1} parent=76 // pred_check
            _
          $region112: #{tpu_custom_call.1} parent=76 // pred_check_branch
            %365 = sbr.rel (0) target = $region114
          $region113: #{tpu_custom_call.1} parent=76 // pred_region
            %366 = vsyncadd %s284, 1152
          $region114: #{tpu_custom_call.1} parent=76 // pred_fallthru
            _
        $region77: #{tpu_custom_call.1} parent=31 // pred_fallthru
          _
        %v367 = vld [vmem:[%s266] sm:$0xff]
        %v368 = vld [vmem:[%s266 + $0x8] sm:$0xff]
        %v369 = vld [vmem:[%s266 + $0x10] sm:$0x3]
        %v370 = vld [vmem:[%s266 + $0x18] sm:$0xff]
        %v371 = vld [vmem:[%s266 + $0x20] sm:$0xff]
        %v372 = vld [vmem:[%s266 + $0x28] sm:$0x3]
        %v373 = vld [vmem:[%s266 + $0x30] sm:$0xff]
        %v374 = vld [vmem:[%s266 + $0x38] sm:$0xff]
        %v375 = vld [vmem:[%s266 + $0x40] sm:$0x3]
        %v376 = vld [vmem:[%s266 + $0x48] sm:$0xff]
        %v377 = vld [vmem:[%s266 + $0x50] sm:$0xff]
        %v378 = vld [vmem:[%s266 + $0x58] sm:$0x3]
        %v379 = vld [vmem:[%s1] sm:$0x7]
        %v380 = vcombine.low %v367, %v373
        %v381 = vcombine.high %v367, %v373
        %v383 = vunpack.c.l.s4 1983009808
        %v384 = vunpack.c.0.s8 %v383
        %v385 = vlaneseq
        %v386 = vshrl.u32 %v385, 7
        %v387 = vsub.s32 %v384, %v386
        %v388 = vrot.slane %v380, %v387
        %v390 = vunpack.c.l.s4 1983009808
        %v391 = vunpack.c.0.s8 %v390
        %v392 = vlaneseq
        %v393 = vshrl.u32 %v392, 7
        %v394 = vsub.s32 %v391, %v393
        %v395 = vrot.slane %v381, %v394
        %v396 = vcombine.low %v370, %v376
        %v397 = vcombine.high %v370, %v376
        %v399 = vunpack.c.l.s4 1983009808
        %v400 = vunpack.c.0.s8 %v399
        %v401 = vlaneseq
        %v402 = vshrl.u32 %v401, 7
        %v403 = vsub.s32 %v400, %v402
        %v404 = vrot.slane %v396, %v403
        %v406 = vunpack.c.l.s4 1983009808
        %v407 = vunpack.c.0.s8 %v406
        %v408 = vlaneseq
        %v409 = vshrl.u32 %v408, 7
        %v410 = vsub.s32 %v407, %v409
        %v411 = vrot.slane %v397, %v410
        %v412 = vcombine.low %v388, %v404
        %v413 = vcombine.high %v388, %v404
        %v415 = vunpack.c.l.s4 1934713408
        %v416 = vunpack.c.0.s8 %v415
        %v417 = vlaneseq
        %v418 = vshrl.u32 %v417, 7
        %v419 = vsub.s32 %v416, %v418
        %v420 = vrot.slane %v412, %v419
        %v422 = vunpack.c.l.s4 1934713408
        %v423 = vunpack.c.0.s8 %v422
        %v424 = vlaneseq
        %v425 = vshrl.u32 %v424, 7
        %v426 = vsub.s32 %v423, %v425
        %v427 = vrot.slane %v413, %v426
        %v428 = vcombine.low %v395, %v411
        %v429 = vcombine.high %v395, %v411
        %v431 = vunpack.c.l.s4 1934713408
        %v432 = vunpack.c.0.s8 %v431
        %v433 = vlaneseq
        %v434 = vshrl.u32 %v433, 7
        %v435 = vsub.s32 %v432, %v434
        %v436 = vrot.slane %v428, %v435
        %v438 = vunpack.c.l.s4 1934713408
        %v439 = vunpack.c.0.s8 %v438
        %v440 = vlaneseq
        %v441 = vshrl.u32 %v440, 7
        %v442 = vsub.s32 %v439, %v441
        %v443 = vrot.slane %v429, %v442
        %v444 = vcombine.high %v420, 0.0
        %v445 = vcombine.high %v427, 0.0
        %v446 = vcombine.high %v436, 0.0
        %v447 = vcombine.high %v443, 0.0
        %v448 = vcombine.low %v368, %v374
        %v449 = vcombine.high %v368, %v374
        %v451 = vunpack.c.l.s4 1983009808
        %v452 = vunpack.c.0.s8 %v451
        %v453 = vlaneseq
        %v454 = vshrl.u32 %v453, 7
        %v455 = vsub.s32 %v452, %v454
        %v456 = vrot.slane %v448, %v455
        %v458 = vunpack.c.l.s4 1983009808
        %v459 = vunpack.c.0.s8 %v458
        %v460 = vlaneseq
        %v461 = vshrl.u32 %v460, 7
        %v462 = vsub.s32 %v459, %v461
        %v463 = vrot.slane %v449, %v462
        %v464 = vcombine.low %v371, %v377
        %v465 = vcombine.high %v371, %v377
        %v467 = vunpack.c.l.s4 1983009808
        %v468 = vunpack.c.0.s8 %v467
        %v469 = vlaneseq
        %v470 = vshrl.u32 %v469, 7
        %v471 = vsub.s32 %v468, %v470
        %v472 = vrot.slane %v464, %v471
        %v474 = vunpack.c.l.s4 1983009808
        %v475 = vunpack.c.0.s8 %v474
        %v476 = vlaneseq
        %v477 = vshrl.u32 %v476, 7
        %v478 = vsub.s32 %v475, %v477
        %v479 = vrot.slane %v465, %v478
        %v480 = vcombine.low %v456, %v472
        %v481 = vcombine.high %v456, %v472
        %v483 = vunpack.c.l.s4 1934713408
        %v484 = vunpack.c.0.s8 %v483
        %v485 = vlaneseq
        %v486 = vshrl.u32 %v485, 7
        %v487 = vsub.s32 %v484, %v486
        %v488 = vrot.slane %v480, %v487
        %v490 = vunpack.c.l.s4 1934713408
        %v491 = vunpack.c.0.s8 %v490
        %v492 = vlaneseq
        %v493 = vshrl.u32 %v492, 7
        %v494 = vsub.s32 %v491, %v493
        %v495 = vrot.slane %v481, %v494
        %v496 = vcombine.low %v463, %v479
        %v497 = vcombine.high %v463, %v479
        %v499 = vunpack.c.l.s4 1934713408
        %v500 = vunpack.c.0.s8 %v499
        %v501 = vlaneseq
        %v502 = vshrl.u32 %v501, 7
        %v503 = vsub.s32 %v500, %v502
        %v504 = vrot.slane %v496, %v503
        %v506 = vunpack.c.l.s4 1934713408
        %v507 = vunpack.c.0.s8 %v506
        %v508 = vlaneseq
        %v509 = vshrl.u32 %v508, 7
        %v510 = vsub.s32 %v507, %v509
        %v511 = vrot.slane %v497, %v510
        %v512 = vcombine.high %v488, 0.0
        %v513 = vcombine.high %v495, 0.0
        %v514 = vcombine.high %v504, 0.0
        %v515 = vcombine.high %v511, 0.0
        %v516 = vcombine.low %v369, %v375
        %v518 = vunpack.c.l.s4 1983009808
        %v519 = vunpack.c.0.s8 %v518
        %v520 = vlaneseq
        %v521 = vshrl.u32 %v520, 7
        %v522 = vsub.s32 %v519, %v521
        %v523 = vrot.slane %v516, %v522
        %v524 = vcombine.low %v372, %v378
        %v526 = vunpack.c.l.s4 1983009808
        %v527 = vunpack.c.0.s8 %v526
        %v528 = vlaneseq
        %v529 = vshrl.u32 %v528, 7
        %v530 = vsub.s32 %v527, %v529
        %v531 = vrot.slane %v524, %v530
        %v532 = vcombine.low %v523, %v531
        %v534 = vunpack.c.l.s4 1934713408
        %v535 = vunpack.c.0.s8 %v534
        %v536 = vlaneseq
        %v537 = vshrl.u32 %v536, 7
        %v538 = vsub.s32 %v535, %v537
        %v539 = vrot.slane %v532, %v538
        %v540 = vcombine.high %v539, 0.0
        %vm541 = vcmask 31744
        %v543 = vsel %vm541, %v379, 0
        %vm545 = vcmask 1043456
        %v547 = vsel %vm545, %v420, 0
        %v550 = vsel %vm545, %v444, 0
        %v553 = vsel %vm545, %v427, 0
        %v556 = vsel %vm545, %v445, 0
        %v559 = vsel %vm545, %v436, 0
        %v562 = vsel %vm545, %v446, 0
        %v565 = vsel %vm545, %v443, 0
        %v568 = vsel %vm545, %v447, 0
        %v571 = vsel %vm545, %v488, 0
        %v574 = vsel %vm545, %v512, 0
        %v577 = vsel %vm545, %v495, 0
        %v580 = vsel %vm545, %v513, 0
        %v583 = vsel %vm545, %v504, 0
        %v586 = vsel %vm545, %v514, 0
        %v589 = vsel %vm545, %v511, 0
        %v592 = vsel %vm545, %v515, 0
        %v595 = vsel %vm545, %v539, 0
        %v598 = vsel %vm545, %v540, 0
        %600 = vmatprep.subr.mxu0 0.0
        %601 = vmatpush1.msra.mxu0 0.0
        %602 = vmatprep.subr.mxu0 0.0
        %603 = vmatpush1.msra.mxu0 0.0
        %604 = vmatprep.subr.mxu0 0.0
        %605 = vmatpush1.msra.mxu0 0.0
        %606 = vmatprep.subr.mxu0 0.0
        %607 = vmatpush1.msra.mxu0 0.0
        %608 = vmatprep.subr.mxu0 0.0
        %609 = vmatpush1.msra.mxu0 0.0
        %610 = vmatprep.subr.mxu0 0.0
        %611 = vmatpush1.msra.mxu0 0.0
        %612 = vmatprep.subr.mxu0 0.0
        %613 = vmatpush1.msra.mxu0 0.0
        %614 = vmatprep.subr.mxu0 0.0
        %615 = vmatpush1.msra.mxu0 0.0
        %616 = vmatprep.subr.mxu0 0.0
        %617 = vmatpush1.msra.mxu0 0.0
        %618 = vmatprep.subr.mxu0 0.0
        %619 = vmatpush1.msra.mxu0 0.0
        %620 = vmatprep.subr.mxu0 0.0
        %621 = vmatpush1.msra.mxu0 0.0
        %622 = vmatprep.subr.mxu0 0.0
        %623 = vmatpush1.msra.mxu0 0.0
        %624 = vmatprep.subr.mxu0 0.0
        %625 = vmatpush1.msra.mxu0 0.0
        %626 = vmatprep.subr.mxu0 0.0
        %627 = vmatpush1.msra.mxu0 0.0
        %628 = vmatprep.subr.mxu0 0.0
        %629 = vmatpush1.msra.mxu0 0.0
        %630 = vmatprep.subr.mxu0 %v550
        %631 = vmatpush1.msra.mxu0 %v547
        %632 = vmatprep.subr.mxu0 0.0
        %633 = vmatpush2.msra.mxu0 0.0
        %634 = vmatprep.subr.mxu0 0.0
        %635 = vmatpush2.msra.mxu0 0.0
        %636 = vmatprep.subr.mxu0 0.0
        %637 = vmatpush2.msra.mxu0 0.0
        %638 = vmatprep.subr.mxu0 0.0
        %639 = vmatpush2.msra.mxu0 0.0
        %640 = vmatprep.subr.mxu0 0.0
        %641 = vmatpush2.msra.mxu0 0.0
        %642 = vmatprep.subr.mxu0 0.0
        %643 = vmatpush2.msra.mxu0 0.0
        %644 = vmatprep.subr.mxu0 0.0
        %645 = vmatpush2.msra.mxu0 0.0
        %646 = vmatprep.subr.mxu0 0.0
        %647 = vmatpush2.msra.mxu0 0.0
        %648 = vmatprep.subr.mxu0 0.0
        %649 = vmatpush2.msra.mxu0 0.0
        %650 = vmatprep.subr.mxu0 0.0
        %651 = vmatpush2.msra.mxu0 0.0
        %652 = vmatprep.subr.mxu0 0.0
        %653 = vmatpush2.msra.mxu0 0.0
        %654 = vmatprep.subr.mxu0 0.0
        %655 = vmatpush2.msra.mxu0 0.0
        %656 = vmatprep.subr.mxu0 0.0
        %657 = vmatpush2.msra.mxu0 0.0
        %658 = vmatprep.subr.mxu0 0.0
        %659 = vmatpush2.msra.mxu0 0.0
        %660 = vmatprep.subr.mxu0 0.0
        %661 = vmatpush2.msra.mxu0 0.0
        %662 = vmatprep.subr.mxu0 0.0
        %663 = vmatpush2.msra.mxu0 0.0
        %664 = vmatprep.mubr.f32.mxu0 0.0
        %665 = vmatmul.mubr.f32.gmra.mxu0 %v543
        %v666 = vpop.f32.mrf.mxu0
        %v667 = vadd.f32 0.0, %v666
        %v668 = vpop.f32.mrf.mxu0
        %v669 = vadd.f32 0.0, %v668
        %670 = vdwg.mxu0
        %671 = vmatprep.subr.mxu0 0.0
        %672 = vmatpush1.msra.mxu0 0.0
        %673 = vmatprep.subr.mxu0 0.0
        %674 = vmatpush1.msra.mxu0 0.0
        %675 = vmatprep.subr.mxu0 0.0
        %676 = vmatpush1.msra.mxu0 0.0
        %677 = vmatprep.subr.mxu0 0.0
        %678 = vmatpush1.msra.mxu0 0.0
        %679 = vmatprep.subr.mxu0 0.0
        %680 = vmatpush1.msra.mxu0 0.0
        %681 = vmatprep.subr.mxu0 0.0
        %682 = vmatpush1.msra.mxu0 0.0
        %683 = vmatprep.subr.mxu0 0.0
        %684 = vmatpush1.msra.mxu0 0.0
        %685 = vmatprep.subr.mxu0 0.0
        %686 = vmatpush1.msra.mxu0 0.0
        %687 = vmatprep.subr.mxu0 0.0
        %688 = vmatpush1.msra.mxu0 0.0
        %689 = vmatprep.subr.mxu0 0.0
        %690 = vmatpush1.msra.mxu0 0.0
        %691 = vmatprep.subr.mxu0 0.0
        %692 = vmatpush1.msra.mxu0 0.0
        %693 = vmatprep.subr.mxu0 0.0
        %694 = vmatpush1.msra.mxu0 0.0
        %695 = vmatprep.subr.mxu0 0.0
        %696 = vmatpush1.msra.mxu0 0.0
        %697 = vmatprep.subr.mxu0 0.0
        %698 = vmatpush1.msra.mxu0 0.0
        %699 = vmatprep.subr.mxu0 0.0
        %700 = vmatpush1.msra.mxu0 0.0
        %701 = vmatprep.subr.mxu0 %v556
        %702 = vmatpush1.msra.mxu0 %v553
        %703 = vmatprep.subr.mxu0 0.0
        %704 = vmatpush2.msra.mxu0 0.0
        %705 = vmatprep.subr.mxu0 0.0
        %706 = vmatpush2.msra.mxu0 0.0
        %707 = vmatprep.subr.mxu0 0.0
        %708 = vmatpush2.msra.mxu0 0.0
        %709 = vmatprep.subr.mxu0 0.0
        %710 = vmatpush2.msra.mxu0 0.0
        %711 = vmatprep.subr.mxu0 0.0
        %712 = vmatpush2.msra.mxu0 0.0
        %713 = vmatprep.subr.mxu0 0.0
        %714 = vmatpush2.msra.mxu0 0.0
        %715 = vmatprep.subr.mxu0 0.0
        %716 = vmatpush2.msra.mxu0 0.0
        %717 = vmatprep.subr.mxu0 0.0
        %718 = vmatpush2.msra.mxu0 0.0
        %719 = vmatprep.subr.mxu0 0.0
        %720 = vmatpush2.msra.mxu0 0.0
        %721 = vmatprep.subr.mxu0 0.0
        %722 = vmatpush2.msra.mxu0 0.0
        %723 = vmatprep.subr.mxu0 0.0
        %724 = vmatpush2.msra.mxu0 0.0
        %725 = vmatprep.subr.mxu0 0.0
        %726 = vmatpush2.msra.mxu0 0.0
        %727 = vmatprep.subr.mxu0 0.0
        %728 = vmatpush2.msra.mxu0 0.0
        %729 = vmatprep.subr.mxu0 0.0
        %730 = vmatpush2.msra.mxu0 0.0
        %731 = vmatprep.subr.mxu0 0.0
        %732 = vmatpush2.msra.mxu0 0.0
        %733 = vmatprep.subr.mxu0 0.0
        %734 = vmatpush2.msra.mxu0 0.0
        %735 = vmatprep.mubr.f32.mxu0 0.0
        %736 = vmatmul.mubr.f32.gmra.mxu0 %v543
        %v737 = vpop.f32.mrf.mxu0
        %v738 = vadd.f32 0.0, %v737
        %v739 = vpop.f32.mrf.mxu0
        %v740 = vadd.f32 0.0, %v739
        %741 = vdwg.mxu0
        %742 = vmatprep.subr.mxu0 0.0
        %743 = vmatpush1.msra.mxu0 0.0
        %744 = vmatprep.subr.mxu0 0.0
        %745 = vmatpush1.msra.mxu0 0.0
        %746 = vmatprep.subr.mxu0 0.0
        %747 = vmatpush1.msra.mxu0 0.0
        %748 = vmatprep.subr.mxu0 0.0
        %749 = vmatpush1.msra.mxu0 0.0
        %750 = vmatprep.subr.mxu0 0.0
        %751 = vmatpush1.msra.mxu0 0.0
        %752 = vmatprep.subr.mxu0 0.0
        %753 = vmatpush1.msra.mxu0 0.0
        %754 = vmatprep.subr.mxu0 0.0
        %755 = vmatpush1.msra.mxu0 0.0
        %756 = vmatprep.subr.mxu0 0.0
        %757 = vmatpush1.msra.mxu0 0.0
        %758 = vmatprep.subr.mxu0 0.0
        %759 = vmatpush1.msra.mxu0 0.0
        %760 = vmatprep.subr.mxu0 0.0
        %761 = vmatpush1.msra.mxu0 0.0
        %762 = vmatprep.subr.mxu0 0.0
        %763 = vmatpush1.msra.mxu0 0.0
        %764 = vmatprep.subr.mxu0 0.0
        %765 = vmatpush1.msra.mxu0 0.0
        %766 = vmatprep.subr.mxu0 0.0
        %767 = vmatpush1.msra.mxu0 0.0
        %768 = vmatprep.subr.mxu0 0.0
        %769 = vmatpush1.msra.mxu0 0.0
        %770 = vmatprep.subr.mxu0 0.0
        %771 = vmatpush1.msra.mxu0 0.0
        %772 = vmatprep.subr.mxu0 %v562
        %773 = vmatpush1.msra.mxu0 %v559
        %774 = vmatprep.subr.mxu0 0.0
        %775 = vmatpush2.msra.mxu0 0.0
        %776 = vmatprep.subr.mxu0 0.0
        %777 = vmatpush2.msra.mxu0 0.0
        %778 = vmatprep.subr.mxu0 0.0
        %779 = vmatpush2.msra.mxu0 0.0
        %780 = vmatprep.subr.mxu0 0.0
        %781 = vmatpush2.msra.mxu0 0.0
        %782 = vmatprep.subr.mxu0 0.0
        %783 = vmatpush2.msra.mxu0 0.0
        %784 = vmatprep.subr.mxu0 0.0
        %785 = vmatpush2.msra.mxu0 0.0
        %786 = vmatprep.subr.mxu0 0.0
        %787 = vmatpush2.msra.mxu0 0.0
        %788 = vmatprep.subr.mxu0 0.0
        %789 = vmatpush2.msra.mxu0 0.0
        %790 = vmatprep.subr.mxu0 0.0
        %791 = vmatpush2.msra.mxu0 0.0
        %792 = vmatprep.subr.mxu0 0.0
        %793 = vmatpush2.msra.mxu0 0.0
        %794 = vmatprep.subr.mxu0 0.0
        %795 = vmatpush2.msra.mxu0 0.0
        %796 = vmatprep.subr.mxu0 0.0
        %797 = vmatpush2.msra.mxu0 0.0
        %798 = vmatprep.subr.mxu0 0.0
        %799 = vmatpush2.msra.mxu0 0.0
        %800 = vmatprep.subr.mxu0 0.0
        %801 = vmatpush2.msra.mxu0 0.0
        %802 = vmatprep.subr.mxu0 0.0
        %803 = vmatpush2.msra.mxu0 0.0
        %804 = vmatprep.subr.mxu0 0.0
        %805 = vmatpush2.msra.mxu0 0.0
        %806 = vmatprep.mubr.f32.mxu0 0.0
        %807 = vmatmul.mubr.f32.gmra.mxu0 %v543
        %v808 = vpop.f32.mrf.mxu0
        %v809 = vadd.f32 0.0, %v808
        %v810 = vpop.f32.mrf.mxu0
        %v811 = vadd.f32 0.0, %v810
        %812 = vdwg.mxu0
        %813 = vmatprep.subr.mxu0 0.0
        %814 = vmatpush1.msra.mxu0 0.0
        %815 = vmatprep.subr.mxu0 0.0
        %816 = vmatpush1.msra.mxu0 0.0
        %817 = vmatprep.subr.mxu0 0.0
        %818 = vmatpush1.msra.mxu0 0.0
        %819 = vmatprep.subr.mxu0 0.0
        %820 = vmatpush1.msra.mxu0 0.0
        %821 = vmatprep.subr.mxu0 0.0
        %822 = vmatpush1.msra.mxu0 0.0
        %823 = vmatprep.subr.mxu0 0.0
        %824 = vmatpush1.msra.mxu0 0.0
        %825 = vmatprep.subr.mxu0 0.0
        %826 = vmatpush1.msra.mxu0 0.0
        %827 = vmatprep.subr.mxu0 0.0
        %828 = vmatpush1.msra.mxu0 0.0
        %829 = vmatprep.subr.mxu0 0.0
        %830 = vmatpush1.msra.mxu0 0.0
        %831 = vmatprep.subr.mxu0 0.0
        %832 = vmatpush1.msra.mxu0 0.0
        %833 = vmatprep.subr.mxu0 0.0
        %834 = vmatpush1.msra.mxu0 0.0
        %835 = vmatprep.subr.mxu0 0.0
        %836 = vmatpush1.msra.mxu0 0.0
        %837 = vmatprep.subr.mxu0 0.0
        %838 = vmatpush1.msra.mxu0 0.0
        %839 = vmatprep.subr.mxu0 0.0
        %840 = vmatpush1.msra.mxu0 0.0
        %841 = vmatprep.subr.mxu0 0.0
        %842 = vmatpush1.msra.mxu0 0.0
        %843 = vmatprep.subr.mxu0 %v568
        %844 = vmatpush1.msra.mxu0 %v565
        %845 = vmatprep.subr.mxu0 0.0
        %846 = vmatpush2.msra.mxu0 0.0
        %847 = vmatprep.subr.mxu0 0.0
        %848 = vmatpush2.msra.mxu0 0.0
        %849 = vmatprep.subr.mxu0 0.0
        %850 = vmatpush2.msra.mxu0 0.0
        %851 = vmatprep.subr.mxu0 0.0
        %852 = vmatpush2.msra.mxu0 0.0
        %853 = vmatprep.subr.mxu0 0.0
        %854 = vmatpush2.msra.mxu0 0.0
        %855 = vmatprep.subr.mxu0 0.0
        %856 = vmatpush2.msra.mxu0 0.0
        %857 = vmatprep.subr.mxu0 0.0
        %858 = vmatpush2.msra.mxu0 0.0
        %859 = vmatprep.subr.mxu0 0.0
        %860 = vmatpush2.msra.mxu0 0.0
        %861 = vmatprep.subr.mxu0 0.0
        %862 = vmatpush2.msra.mxu0 0.0
        %863 = vmatprep.subr.mxu0 0.0
        %864 = vmatpush2.msra.mxu0 0.0
        %865 = vmatprep.subr.mxu0 0.0
        %866 = vmatpush2.msra.mxu0 0.0
        %867 = vmatprep.subr.mxu0 0.0
        %868 = vmatpush2.msra.mxu0 0.0
        %869 = vmatprep.subr.mxu0 0.0
        %870 = vmatpush2.msra.mxu0 0.0
        %871 = vmatprep.subr.mxu0 0.0
        %872 = vmatpush2.msra.mxu0 0.0
        %873 = vmatprep.subr.mxu0 0.0
        %874 = vmatpush2.msra.mxu0 0.0
        %875 = vmatprep.subr.mxu0 0.0
        %876 = vmatpush2.msra.mxu0 0.0
        %877 = vmatprep.mubr.f32.mxu0 0.0
        %878 = vmatmul.mubr.f32.gmra.mxu0 %v543
        %v879 = vpop.f32.mrf.mxu0
        %v880 = vadd.f32 0.0, %v879
        %v881 = vpop.f32.mrf.mxu0
        %v882 = vadd.f32 0.0, %v881
        %883 = vdwg.mxu0
        %884 = vmatprep.subr.mxu0 0.0
        %885 = vmatpush1.msra.mxu0 0.0
        %886 = vmatprep.subr.mxu0 0.0
        %887 = vmatpush1.msra.mxu0 0.0
        %888 = vmatprep.subr.mxu0 0.0
        %889 = vmatpush1.msra.mxu0 0.0
        %890 = vmatprep.subr.mxu0 0.0
        %891 = vmatpush1.msra.mxu0 0.0
        %892 = vmatprep.subr.mxu0 0.0
        %893 = vmatpush1.msra.mxu0 0.0
        %894 = vmatprep.subr.mxu0 0.0
        %895 = vmatpush1.msra.mxu0 0.0
        %896 = vmatprep.subr.mxu0 0.0
        %897 = vmatpush1.msra.mxu0 0.0
        %898 = vmatprep.subr.mxu0 0.0
        %899 = vmatpush1.msra.mxu0 0.0
        %900 = vmatprep.subr.mxu0 0.0
        %901 = vmatpush1.msra.mxu0 0.0
        %902 = vmatprep.subr.mxu0 0.0
        %903 = vmatpush1.msra.mxu0 0.0
        %904 = vmatprep.subr.mxu0 0.0
        %905 = vmatpush1.msra.mxu0 0.0
        %906 = vmatprep.subr.mxu0 0.0
        %907 = vmatpush1.msra.mxu0 0.0
        %908 = vmatprep.subr.mxu0 0.0
        %909 = vmatpush1.msra.mxu0 0.0
        %910 = vmatprep.subr.mxu0 0.0
        %911 = vmatpush1.msra.mxu0 0.0
        %912 = vmatprep.subr.mxu0 0.0
        %913 = vmatpush1.msra.mxu0 0.0
        %914 = vmatprep.subr.mxu0 %v574
        %915 = vmatpush1.msra.mxu0 %v571
        %916 = vmatprep.subr.mxu0 0.0
        %917 = vmatpush2.msra.mxu0 0.0
        %918 = vmatprep.subr.mxu0 0.0
        %919 = vmatpush2.msra.mxu0 0.0
        %920 = vmatprep.subr.mxu0 0.0
        %921 = vmatpush2.msra.mxu0 0.0
        %922 = vmatprep.subr.mxu0 0.0
        %923 = vmatpush2.msra.mxu0 0.0
        %924 = vmatprep.subr.mxu0 0.0
        %925 = vmatpush2.msra.mxu0 0.0
        %926 = vmatprep.subr.mxu0 0.0
        %927 = vmatpush2.msra.mxu0 0.0
        %928 = vmatprep.subr.mxu0 0.0
        %929 = vmatpush2.msra.mxu0 0.0
        %930 = vmatprep.subr.mxu0 0.0
        %931 = vmatpush2.msra.mxu0 0.0
        %932 = vmatprep.subr.mxu0 0.0
        %933 = vmatpush2.msra.mxu0 0.0
        %934 = vmatprep.subr.mxu0 0.0
        %935 = vmatpush2.msra.mxu0 0.0
        %936 = vmatprep.subr.mxu0 0.0
        %937 = vmatpush2.msra.mxu0 0.0
        %938 = vmatprep.subr.mxu0 0.0
        %939 = vmatpush2.msra.mxu0 0.0
        %940 = vmatprep.subr.mxu0 0.0
        %941 = vmatpush2.msra.mxu0 0.0
        %942 = vmatprep.subr.mxu0 0.0
        %943 = vmatpush2.msra.mxu0 0.0
        %944 = vmatprep.subr.mxu0 0.0
        %945 = vmatpush2.msra.mxu0 0.0
        %946 = vmatprep.subr.mxu0 0.0
        %947 = vmatpush2.msra.mxu0 0.0
        %948 = vmatprep.mubr.f32.mxu0 0.0
        %949 = vmatmul.mubr.f32.gmra.mxu0 %v543
        %v950 = vpop.f32.mrf.mxu0
        %v951 = vadd.f32 0.0, %v950
        %v952 = vpop.f32.mrf.mxu0
        %v953 = vadd.f32 0.0, %v952
        %954 = vdwg.mxu0
        %955 = vmatprep.subr.mxu0 0.0
        %956 = vmatpush1.msra.mxu0 0.0
        %957 = vmatprep.subr.mxu0 0.0
        %958 = vmatpush1.msra.mxu0 0.0
        %959 = vmatprep.subr.mxu0 0.0
        %960 = vmatpush1.msra.mxu0 0.0
        %961 = vmatprep.subr.mxu0 0.0
        %962 = vmatpush1.msra.mxu0 0.0
        %963 = vmatprep.subr.mxu0 0.0
        %964 = vmatpush1.msra.mxu0 0.0
        %965 = vmatprep.subr.mxu0 0.0
        %966 = vmatpush1.msra.mxu0 0.0
        %967 = vmatprep.subr.mxu0 0.0
        %968 = vmatpush1.msra.mxu0 0.0
        %969 = vmatprep.subr.mxu0 0.0
        %970 = vmatpush1.msra.mxu0 0.0
        %971 = vmatprep.subr.mxu0 0.0
        %972 = vmatpush1.msra.mxu0 0.0
        %973 = vmatprep.subr.mxu0 0.0
        %974 = vmatpush1.msra.mxu0 0.0
        %975 = vmatprep.subr.mxu0 0.0
        %976 = vmatpush1.msra.mxu0 0.0
        %977 = vmatprep.subr.mxu0 0.0
        %978 = vmatpush1.msra.mxu0 0.0
        %979 = vmatprep.subr.mxu0 0.0
        %980 = vmatpush1.msra.mxu0 0.0
        %981 = vmatprep.subr.mxu0 0.0
        %982 = vmatpush1.msra.mxu0 0.0
        %983 = vmatprep.subr.mxu0 0.0
        %984 = vmatpush1.msra.mxu0 0.0
        %985 = vmatprep.subr.mxu0 %v580
        %986 = vmatpush1.msra.mxu0 %v577
        %987 = vmatprep.subr.mxu0 0.0
        %988 = vmatpush2.msra.mxu0 0.0
        %989 = vmatprep.subr.mxu0 0.0
        %990 = vmatpush2.msra.mxu0 0.0
        %991 = vmatprep.subr.mxu0 0.0
        %992 = vmatpush2.msra.mxu0 0.0
        %993 = vmatprep.subr.mxu0 0.0
        %994 = vmatpush2.msra.mxu0 0.0
        %995 = vmatprep.subr.mxu0 0.0
        %996 = vmatpush2.msra.mxu0 0.0
        %997 = vmatprep.subr.mxu0 0.0
        %998 = vmatpush2.msra.mxu0 0.0
        %999 = vmatprep.subr.mxu0 0.0
        %1000 = vmatpush2.msra.mxu0 0.0
        %1001 = vmatprep.subr.mxu0 0.0
        %1002 = vmatpush2.msra.mxu0 0.0
        %1003 = vmatprep.subr.mxu0 0.0
        %1004 = vmatpush2.msra.mxu0 0.0
        %1005 = vmatprep.subr.mxu0 0.0
        %1006 = vmatpush2.msra.mxu0 0.0
        %1007 = vmatprep.subr.mxu0 0.0
        %1008 = vmatpush2.msra.mxu0 0.0
        %1009 = vmatprep.subr.mxu0 0.0
        %1010 = vmatpush2.msra.mxu0 0.0
        %1011 = vmatprep.subr.mxu0 0.0
        %1012 = vmatpush2.msra.mxu0 0.0
        %1013 = vmatprep.subr.mxu0 0.0
        %1014 = vmatpush2.msra.mxu0 0.0
        %1015 = vmatprep.subr.mxu0 0.0
        %1016 = vmatpush2.msra.mxu0 0.0
        %1017 = vmatprep.subr.mxu0 0.0
        %1018 = vmatpush2.msra.mxu0 0.0
        %1019 = vmatprep.mubr.f32.mxu0 0.0
        %1020 = vmatmul.mubr.f32.gmra.mxu0 %v543
        %v1021 = vpop.f32.mrf.mxu0
        %v1022 = vadd.f32 0.0, %v1021
        %v1023 = vpop.f32.mrf.mxu0
        %v1024 = vadd.f32 0.0, %v1023
        %1025 = vdwg.mxu0
        %1026 = vmatprep.subr.mxu0 0.0
        %1027 = vmatpush1.msra.mxu0 0.0
        %1028 = vmatprep.subr.mxu0 0.0
        %1029 = vmatpush1.msra.mxu0 0.0
        %1030 = vmatprep.subr.mxu0 0.0
        %1031 = vmatpush1.msra.mxu0 0.0
        %1032 = vmatprep.subr.mxu0 0.0
        %1033 = vmatpush1.msra.mxu0 0.0
        %1034 = vmatprep.subr.mxu0 0.0
        %1035 = vmatpush1.msra.mxu0 0.0
        %1036 = vmatprep.subr.mxu0 0.0
        %1037 = vmatpush1.msra.mxu0 0.0
        %1038 = vmatprep.subr.mxu0 0.0
        %1039 = vmatpush1.msra.mxu0 0.0
        %1040 = vmatprep.subr.mxu0 0.0
        %1041 = vmatpush1.msra.mxu0 0.0
        %1042 = vmatprep.subr.mxu0 0.0
        %1043 = vmatpush1.msra.mxu0 0.0
        %1044 = vmatprep.subr.mxu0 0.0
        %1045 = vmatpush1.msra.mxu0 0.0
        %1046 = vmatprep.subr.mxu0 0.0
        %1047 = vmatpush1.msra.mxu0 0.0
        %1048 = vmatprep.subr.mxu0 0.0
        %1049 = vmatpush1.msra.mxu0 0.0
        %1050 = vmatprep.subr.mxu0 0.0
        %1051 = vmatpush1.msra.mxu0 0.0
        %1052 = vmatprep.subr.mxu0 0.0
        %1053 = vmatpush1.msra.mxu0 0.0
        %1054 = vmatprep.subr.mxu0 0.0
        %1055 = vmatpush1.msra.mxu0 0.0
        %1056 = vmatprep.subr.mxu0 %v586
        %1057 = vmatpush1.msra.mxu0 %v583
        %1058 = vmatprep.subr.mxu0 0.0
        %1059 = vmatpush2.msra.mxu0 0.0
        %1060 = vmatprep.subr.mxu0 0.0
        %1061 = vmatpush2.msra.mxu0 0.0
        %1062 = vmatprep.subr.mxu0 0.0
        %1063 = vmatpush2.msra.mxu0 0.0
        %1064 = vmatprep.subr.mxu0 0.0
        %1065 = vmatpush2.msra.mxu0 0.0
        %1066 = vmatprep.subr.mxu0 0.0
        %1067 = vmatpush2.msra.mxu0 0.0
        %1068 = vmatprep.subr.mxu0 0.0
        %1069 = vmatpush2.msra.mxu0 0.0
        %1070 = vmatprep.subr.mxu0 0.0
        %1071 = vmatpush2.msra.mxu0 0.0
        %1072 = vmatprep.subr.mxu0 0.0
        %1073 = vmatpush2.msra.mxu0 0.0
        %1074 = vmatprep.subr.mxu0 0.0
        %1075 = vmatpush2.msra.mxu0 0.0
        %1076 = vmatprep.subr.mxu0 0.0
        %1077 = vmatpush2.msra.mxu0 0.0
        %1078 = vmatprep.subr.mxu0 0.0
        %1079 = vmatpush2.msra.mxu0 0.0
        %1080 = vmatprep.subr.mxu0 0.0
        %1081 = vmatpush2.msra.mxu0 0.0
        %1082 = vmatprep.subr.mxu0 0.0
        %1083 = vmatpush2.msra.mxu0 0.0
        %1084 = vmatprep.subr.mxu0 0.0
        %1085 = vmatpush2.msra.mxu0 0.0
        %1086 = vmatprep.subr.mxu0 0.0
        %1087 = vmatpush2.msra.mxu0 0.0
        %1088 = vmatprep.subr.mxu0 0.0
        %1089 = vmatpush2.msra.mxu0 0.0
        %1090 = vmatprep.mubr.f32.mxu0 0.0
        %1091 = vmatmul.mubr.f32.gmra.mxu0 %v543
        %v1092 = vpop.f32.mrf.mxu0
        %v1093 = vadd.f32 0.0, %v1092
        %v1094 = vpop.f32.mrf.mxu0
        %v1095 = vadd.f32 0.0, %v1094
        %1096 = vdwg.mxu0
        %1097 = vmatprep.subr.mxu0 0.0
        %1098 = vmatpush1.msra.mxu0 0.0
        %1099 = vmatprep.subr.mxu0 0.0
        %1100 = vmatpush1.msra.mxu0 0.0
        %1101 = vmatprep.subr.mxu0 0.0
        %1102 = vmatpush1.msra.mxu0 0.0
        %1103 = vmatprep.subr.mxu0 0.0
        %1104 = vmatpush1.msra.mxu0 0.0
        %1105 = vmatprep.subr.mxu0 0.0
        %1106 = vmatpush1.msra.mxu0 0.0
        %1107 = vmatprep.subr.mxu0 0.0
        %1108 = vmatpush1.msra.mxu0 0.0
        %1109 = vmatprep.subr.mxu0 0.0
        %1110 = vmatpush1.msra.mxu0 0.0
        %1111 = vmatprep.subr.mxu0 0.0
        %1112 = vmatpush1.msra.mxu0 0.0
        %1113 = vmatprep.subr.mxu0 0.0
        %1114 = vmatpush1.msra.mxu0 0.0
        %1115 = vmatprep.subr.mxu0 0.0
        %1116 = vmatpush1.msra.mxu0 0.0
        %1117 = vmatprep.subr.mxu0 0.0
        %1118 = vmatpush1.msra.mxu0 0.0
        %1119 = vmatprep.subr.mxu0 0.0
        %1120 = vmatpush1.msra.mxu0 0.0
        %1121 = vmatprep.subr.mxu0 0.0
        %1122 = vmatpush1.msra.mxu0 0.0
        %1123 = vmatprep.subr.mxu0 0.0
        %1124 = vmatpush1.msra.mxu0 0.0
        %1125 = vmatprep.subr.mxu0 0.0
        %1126 = vmatpush1.msra.mxu0 0.0
        %1127 = vmatprep.subr.mxu0 %v592
        %1128 = vmatpush1.msra.mxu0 %v589
        %1129 = vmatprep.subr.mxu0 0.0
        %1130 = vmatpush2.msra.mxu0 0.0
        %1131 = vmatprep.subr.mxu0 0.0
        %1132 = vmatpush2.msra.mxu0 0.0
        %1133 = vmatprep.subr.mxu0 0.0
        %1134 = vmatpush2.msra.mxu0 0.0
        %1135 = vmatprep.subr.mxu0 0.0
        %1136 = vmatpush2.msra.mxu0 0.0
        %1137 = vmatprep.subr.mxu0 0.0
        %1138 = vmatpush2.msra.mxu0 0.0
        %1139 = vmatprep.subr.mxu0 0.0
        %1140 = vmatpush2.msra.mxu0 0.0
        %1141 = vmatprep.subr.mxu0 0.0
        %1142 = vmatpush2.msra.mxu0 0.0
        %1143 = vmatprep.subr.mxu0 0.0
        %1144 = vmatpush2.msra.mxu0 0.0
        %1145 = vmatprep.subr.mxu0 0.0
        %1146 = vmatpush2.msra.mxu0 0.0
        %1147 = vmatprep.subr.mxu0 0.0
        %1148 = vmatpush2.msra.mxu0 0.0
        %1149 = vmatprep.subr.mxu0 0.0
        %1150 = vmatpush2.msra.mxu0 0.0
        %1151 = vmatprep.subr.mxu0 0.0
        %1152 = vmatpush2.msra.mxu0 0.0
        %1153 = vmatprep.subr.mxu0 0.0
        %1154 = vmatpush2.msra.mxu0 0.0
        %1155 = vmatprep.subr.mxu0 0.0
        %1156 = vmatpush2.msra.mxu0 0.0
        %1157 = vmatprep.subr.mxu0 0.0
        %1158 = vmatpush2.msra.mxu0 0.0
        %1159 = vmatprep.subr.mxu0 0.0
        %1160 = vmatpush2.msra.mxu0 0.0
        %1161 = vmatprep.mubr.f32.mxu0 0.0
        %1162 = vmatmul.mubr.f32.gmra.mxu0 %v543
        %v1163 = vpop.f32.mrf.mxu0
        %v1164 = vadd.f32 0.0, %v1163
        %v1165 = vpop.f32.mrf.mxu0
        %v1166 = vadd.f32 0.0, %v1165
        %1167 = vdwg.mxu0
        %1168 = vmatprep.subr.mxu0 0.0
        %1169 = vmatpush1.msra.mxu0 0.0
        %1170 = vmatprep.subr.mxu0 0.0
        %1171 = vmatpush1.msra.mxu0 0.0
        %1172 = vmatprep.subr.mxu0 0.0
        %1173 = vmatpush1.msra.mxu0 0.0
        %1174 = vmatprep.subr.mxu0 0.0
        %1175 = vmatpush1.msra.mxu0 0.0
        %1176 = vmatprep.subr.mxu0 0.0
        %1177 = vmatpush1.msra.mxu0 0.0
        %1178 = vmatprep.subr.mxu0 0.0
        %1179 = vmatpush1.msra.mxu0 0.0
        %1180 = vmatprep.subr.mxu0 0.0
        %1181 = vmatpush1.msra.mxu0 0.0
        %1182 = vmatprep.subr.mxu0 0.0
        %1183 = vmatpush1.msra.mxu0 0.0
        %1184 = vmatprep.subr.mxu0 0.0
        %1185 = vmatpush1.msra.mxu0 0.0
        %1186 = vmatprep.subr.mxu0 0.0
        %1187 = vmatpush1.msra.mxu0 0.0
        %1188 = vmatprep.subr.mxu0 0.0
        %1189 = vmatpush1.msra.mxu0 0.0
        %1190 = vmatprep.subr.mxu0 0.0
        %1191 = vmatpush1.msra.mxu0 0.0
        %1192 = vmatprep.subr.mxu0 0.0
        %1193 = vmatpush1.msra.mxu0 0.0
        %1194 = vmatprep.subr.mxu0 0.0
        %1195 = vmatpush1.msra.mxu0 0.0
        %1196 = vmatprep.subr.mxu0 0.0
        %1197 = vmatpush1.msra.mxu0 0.0
        %1198 = vmatprep.subr.mxu0 %v598
        %1199 = vmatpush1.msra.mxu0 %v595
        %1200 = vmatprep.subr.mxu0 0.0
        %1201 = vmatpush2.msra.mxu0 0.0
        %1202 = vmatprep.subr.mxu0 0.0
        %1203 = vmatpush2.msra.mxu0 0.0
        %1204 = vmatprep.subr.mxu0 0.0
        %1205 = vmatpush2.msra.mxu0 0.0
        %1206 = vmatprep.subr.mxu0 0.0
        %1207 = vmatpush2.msra.mxu0 0.0
        %1208 = vmatprep.subr.mxu0 0.0
        %1209 = vmatpush2.msra.mxu0 0.0
        %1210 = vmatprep.subr.mxu0 0.0
        %1211 = vmatpush2.msra.mxu0 0.0
        %1212 = vmatprep.subr.mxu0 0.0
        %1213 = vmatpush2.msra.mxu0 0.0
        %1214 = vmatprep.subr.mxu0 0.0
        %1215 = vmatpush2.msra.mxu0 0.0
        %1216 = vmatprep.subr.mxu0 0.0
        %1217 = vmatpush2.msra.mxu0 0.0
        %1218 = vmatprep.subr.mxu0 0.0
        %1219 = vmatpush2.msra.mxu0 0.0
        %1220 = vmatprep.subr.mxu0 0.0
        %1221 = vmatpush2.msra.mxu0 0.0
        %1222 = vmatprep.subr.mxu0 0.0
        %1223 = vmatpush2.msra.mxu0 0.0
        %1224 = vmatprep.subr.mxu0 0.0
        %1225 = vmatpush2.msra.mxu0 0.0
        %1226 = vmatprep.subr.mxu0 0.0
        %1227 = vmatpush2.msra.mxu0 0.0
        %1228 = vmatprep.subr.mxu0 0.0
        %1229 = vmatpush2.msra.mxu0 0.0
        %1230 = vmatprep.subr.mxu0 0.0
        %1231 = vmatpush2.msra.mxu0 0.0
        %1232 = vmatprep.mubr.f32.mxu0 0.0
        %1233 = vmatmul.mubr.f32.gmra.mxu0 %v543
        %v1234 = vpop.f32.mrf.mxu0
        %v1235 = vadd.f32 0.0, %v1234
        %v1236 = vpop.f32.mrf.mxu0
        %v1237 = vadd.f32 0.0, %v1236
        %1238 = vdwg.mxu0
        %v1239 = vcombine.low %v667, %v738
        %v1241 = vunpack.c.l.s4 1983009808
        %v1242 = vunpack.c.0.s8 %v1241
        %v1243 = vlaneseq
        %v1244 = vshrl.u32 %v1243, 7
        %v1245 = vsub.s32 %v1242, %v1244
        %v1246 = vrot.slane %v1239, %v1245
        %v1247 = vcombine.low %v669, %v740
        %v1249 = vunpack.c.l.s4 1983009808
        %v1250 = vunpack.c.0.s8 %v1249
        %v1251 = vlaneseq
        %v1252 = vshrl.u32 %v1251, 7
        %v1253 = vsub.s32 %v1250, %v1252
        %v1254 = vrot.slane %v1247, %v1253
        %v1255 = vcombine.low %v809, %v880
        %v1257 = vunpack.c.l.s4 1983009808
        %v1258 = vunpack.c.0.s8 %v1257
        %v1259 = vlaneseq
        %v1260 = vshrl.u32 %v1259, 7
        %v1261 = vsub.s32 %v1258, %v1260
        %v1262 = vrot.slane %v1255, %v1261
        %v1263 = vcombine.low %v811, %v882
        %v1265 = vunpack.c.l.s4 1983009808
        %v1266 = vunpack.c.0.s8 %v1265
        %v1267 = vlaneseq
        %v1268 = vshrl.u32 %v1267, 7
        %v1269 = vsub.s32 %v1266, %v1268
        %v1270 = vrot.slane %v1263, %v1269
        %v1271 = vcombine.low %v1246, %v1254
        %v1272 = vcombine.high %v1246, %v1254
        %v1274 = vunpack.c.l.s4 1934713408
        %v1275 = vunpack.c.0.s8 %v1274
        %v1276 = vlaneseq
        %v1277 = vshrl.u32 %v1276, 7
        %v1278 = vsub.s32 %v1275, %v1277
        %v1279 = vrot.slane %v1271, %v1278
        %v1281 = vunpack.c.l.s4 1934713408
        %v1282 = vunpack.c.0.s8 %v1281
        %v1283 = vlaneseq
        %v1284 = vshrl.u32 %v1283, 7
        %v1285 = vsub.s32 %v1282, %v1284
        %v1286 = vrot.slane %v1272, %v1285
        %v1287 = vcombine.low %v1262, %v1270
        %v1288 = vcombine.high %v1262, %v1270
        %v1290 = vunpack.c.l.s4 1934713408
        %v1291 = vunpack.c.0.s8 %v1290
        %v1292 = vlaneseq
        %v1293 = vshrl.u32 %v1292, 7
        %v1294 = vsub.s32 %v1291, %v1293
        %v1295 = vrot.slane %v1287, %v1294
        %v1297 = vunpack.c.l.s4 1934713408
        %v1298 = vunpack.c.0.s8 %v1297
        %v1299 = vlaneseq
        %v1300 = vshrl.u32 %v1299, 7
        %v1301 = vsub.s32 %v1298, %v1300
        %v1302 = vrot.slane %v1288, %v1301
        %v1303 = vcombine.low %v1279, %v1295
        %v1304 = vcombine.high %v1279, %v1295
        %v1305 = vcombine.low %v1286, %v1302
        %v1306 = vcombine.low %v951, %v1022
        %v1308 = vunpack.c.l.s4 1983009808
        %v1309 = vunpack.c.0.s8 %v1308
        %v1310 = vlaneseq
        %v1311 = vshrl.u32 %v1310, 7
        %v1312 = vsub.s32 %v1309, %v1311
        %v1313 = vrot.slane %v1306, %v1312
        %v1314 = vcombine.low %v953, %v1024
        %v1316 = vunpack.c.l.s4 1983009808
        %v1317 = vunpack.c.0.s8 %v1316
        %v1318 = vlaneseq
        %v1319 = vshrl.u32 %v1318, 7
        %v1320 = vsub.s32 %v1317, %v1319
        %v1321 = vrot.slane %v1314, %v1320
        %v1322 = vcombine.low %v1093, %v1164
        %v1324 = vunpack.c.l.s4 1983009808
        %v1325 = vunpack.c.0.s8 %v1324
        %v1326 = vlaneseq
        %v1327 = vshrl.u32 %v1326, 7
        %v1328 = vsub.s32 %v1325, %v1327
        %v1329 = vrot.slane %v1322, %v1328
        %v1330 = vcombine.low %v1095, %v1166
        %v1332 = vunpack.c.l.s4 1983009808
        %v1333 = vunpack.c.0.s8 %v1332
        %v1334 = vlaneseq
        %v1335 = vshrl.u32 %v1334, 7
        %v1336 = vsub.s32 %v1333, %v1335
        %v1337 = vrot.slane %v1330, %v1336
        %v1338 = vcombine.low %v1313, %v1321
        %v1339 = vcombine.high %v1313, %v1321
        %v1341 = vunpack.c.l.s4 1934713408
        %v1342 = vunpack.c.0.s8 %v1341
        %v1343 = vlaneseq
        %v1344 = vshrl.u32 %v1343, 7
        %v1345 = vsub.s32 %v1342, %v1344
        %v1346 = vrot.slane %v1338, %v1345
        %v1348 = vunpack.c.l.s4 1934713408
        %v1349 = vunpack.c.0.s8 %v1348
        %v1350 = vlaneseq
        %v1351 = vshrl.u32 %v1350, 7
        %v1352 = vsub.s32 %v1349, %v1351
        %v1353 = vrot.slane %v1339, %v1352
        %v1354 = vcombine.low %v1329, %v1337
        %v1355 = vcombine.high %v1329, %v1337
        %v1357 = vunpack.c.l.s4 1934713408
        %v1358 = vunpack.c.0.s8 %v1357
        %v1359 = vlaneseq
        %v1360 = vshrl.u32 %v1359, 7
        %v1361 = vsub.s32 %v1358, %v1360
        %v1362 = vrot.slane %v1354, %v1361
        %v1364 = vunpack.c.l.s4 1934713408
        %v1365 = vunpack.c.0.s8 %v1364
        %v1366 = vlaneseq
        %v1367 = vshrl.u32 %v1366, 7
        %v1368 = vsub.s32 %v1365, %v1367
        %v1369 = vrot.slane %v1355, %v1368
        %v1370 = vcombine.low %v1346, %v1362
        %v1371 = vcombine.high %v1346, %v1362
        %v1372 = vcombine.low %v1353, %v1369
        %v1374 = vunpack.c.l.s4 1983009808
        %v1375 = vunpack.c.0.s8 %v1374
        %v1376 = vlaneseq
        %v1377 = vshrl.u32 %v1376, 7
        %v1378 = vsub.s32 %v1375, %v1377
        %v1379 = vrot.slane %v1235, %v1378
        %v1381 = vunpack.c.l.s4 1983009808
        %v1382 = vunpack.c.0.s8 %v1381
        %v1383 = vlaneseq
        %v1384 = vshrl.u32 %v1383, 7
        %v1385 = vsub.s32 %v1382, %v1384
        %v1386 = vrot.slane %v1237, %v1385
        %v1387 = vcombine.low %v1379, %v1386
        %v1388 = vcombine.high %v1379, %v1386
        %v1390 = vunpack.c.l.s4 1934713408
        %v1391 = vunpack.c.0.s8 %v1390
        %v1392 = vlaneseq
        %v1393 = vshrl.u32 %v1392, 7
        %v1394 = vsub.s32 %v1391, %v1393
        %v1395 = vrot.slane %v1387, %v1394
        %v1396 = vcombine.high %v1395, 0.0
        %v1398 = vunpack.c.l.s4 1934713408
        %v1399 = vunpack.c.0.s8 %v1398
        %v1400 = vlaneseq
        %v1401 = vshrl.u32 %v1400, 7
        %v1402 = vsub.s32 %v1399, %v1401
        %v1403 = vrot.slane %v1388, %v1402
        %1406 = vrot.lane.b32.xlu0 %v1303, 127
        %v1407 = vpop.permute.xlu0 %1406
        %1408 = vrot.lane.b32.xlu0 %v1370, 127
        %v1409 = vpop.permute.xlu0 %1408
        %1412 = vrot.lane.b32.xlu0 %v1303, 126
        %v1413 = vpop.permute.xlu0 %1412
        %1414 = vrot.lane.b32.xlu0 %v1370, 126
        %v1415 = vpop.permute.xlu0 %1414
        %vm1419 = vcmask 1046528
        %v1420 = vrot.slane %v1303, 1
        %v1421 = vrot.slane %v1370, 1
        %v1422 = vsel %vm1419, %v1420, %v1421
        %v1423 = vrot.slane %v1395, 1
        %v1424 = vsel %vm1419, %v1421, %v1423
        %1427 = vrot.lane.b32.xlu0 %v1422, 127
        %v1428 = vpop.permute.xlu0 %1427
        %1429 = vrot.lane.b32.xlu0 %v1424, 127
        %v1430 = vpop.permute.xlu0 %1429
        %1433 = vrot.lane.b32.xlu0 %v1422, 126
        %v1434 = vpop.permute.xlu0 %1433
        %1435 = vrot.lane.b32.xlu0 %v1424, 126
        %v1436 = vpop.permute.xlu0 %1435
        %vm1439 = vcmask 1045504
        %v1440 = vrot.slane %v1303, 2
        %v1441 = vrot.slane %v1370, 2
        %v1442 = vsel %vm1439, %v1440, %v1441
        %v1443 = vrot.slane %v1395, 2
        %v1444 = vsel %vm1439, %v1441, %v1443
        %1447 = vrot.lane.b32.xlu0 %v1442, 127
        %v1448 = vpop.permute.xlu0 %1447
        %1449 = vrot.lane.b32.xlu0 %v1444, 127
        %v1450 = vpop.permute.xlu0 %1449
        %1453 = vrot.lane.b32.xlu0 %v1442, 126
        %v1454 = vpop.permute.xlu0 %1453
        %1455 = vrot.lane.b32.xlu0 %v1444, 126
        %v1456 = vpop.permute.xlu0 %1455
        %1461 = vrot.lane.b32.xlu0 %v1304, 127
        %v1462 = vpop.permute.xlu0 %1461
        %1463 = vrot.lane.b32.xlu0 %v1371, 127
        %v1464 = vpop.permute.xlu0 %1463
        %1467 = vrot.lane.b32.xlu0 %v1304, 126
        %v1468 = vpop.permute.xlu0 %1467
        %1469 = vrot.lane.b32.xlu0 %v1371, 126
        %v1470 = vpop.permute.xlu0 %1469
        %v1474 = vrot.slane %v1304, 1
        %v1475 = vrot.slane %v1371, 1
        %v1476 = vsel %vm1419, %v1474, %v1475
        %v1477 = vrot.slane %v1396, 1
        %v1478 = vsel %vm1419, %v1475, %v1477
        %1481 = vrot.lane.b32.xlu0 %v1476, 127
        %v1482 = vpop.permute.xlu0 %1481
        %1483 = vrot.lane.b32.xlu0 %v1478, 127
        %v1484 = vpop.permute.xlu0 %1483
        %1487 = vrot.lane.b32.xlu0 %v1476, 126
        %v1488 = vpop.permute.xlu0 %1487
        %1489 = vrot.lane.b32.xlu0 %v1478, 126
        %v1490 = vpop.permute.xlu0 %1489
        %v1493 = vrot.slane %v1304, 2
        %v1494 = vrot.slane %v1371, 2
        %v1495 = vsel %vm1439, %v1493, %v1494
        %v1496 = vrot.slane %v1396, 2
        %v1497 = vsel %vm1439, %v1494, %v1496
        %1500 = vrot.lane.b32.xlu0 %v1396, 127
        %v1501 = vpop.permute.xlu0 %1500
        %vm1504 = vcmask 1041408
        %v1505 = vrot.slane %v1305, 6
        %v1506 = vrot.slane %v1372, 6
        %v1507 = vsel %vm1504, %v1505, %v1506
        %1508 = vrot.lane.b32.xlu0 %v1505, 1
        %v1509 = vpop.permute.xlu0 %1508
        %1510 = vrot.lane.b32.xlu0 %v1507, 1
        %v1511 = vpop.permute.xlu0 %1510
        %1512 = vrot.lane.b32.xlu0 %v1506, 1
        %v1513 = vpop.permute.xlu0 %1512
        %1514 = vrot.lane.b32.xlu0 %v1505, 127
        %v1515 = vpop.permute.xlu0 %1514
        %1516 = vrot.lane.b32.xlu0 %v1507, 127
        %v1517 = vpop.permute.xlu0 %1516
        %1518 = vrot.lane.b32.xlu0 %v1506, 127
        %v1519 = vpop.permute.xlu0 %1518
        %vm1521 = vcmask 1040384
        %v1522 = vrot.slane %v1305, 7
        %v1523 = vrot.slane %v1372, 7
        %v1524 = vsel %vm1521, %v1522, %v1523
        %v1525 = vrot.slane %v1403, 7
        %v1526 = vsel %vm1521, %v1523, %v1525
        %1527 = vrot.lane.b32.xlu0 %v1522, 1
        %v1528 = vpop.permute.xlu0 %1527
        %1529 = vrot.lane.b32.xlu0 %v1524, 1
        %v1530 = vpop.permute.xlu0 %1529
        %1531 = vrot.lane.b32.xlu0 %v1526, 1
        %v1532 = vpop.permute.xlu0 %1531
        %1533 = vrot.lane.b32.xlu0 %v1522, 127
        %v1534 = vpop.permute.xlu0 %1533
        %1535 = vrot.lane.b32.xlu0 %v1524, 127
        %v1536 = vpop.permute.xlu0 %1535
        %1537 = vrot.lane.b32.xlu0 %v1526, 127
        %v1538 = vpop.permute.xlu0 %1537
        %1539 = vrot.lane.b32.xlu0 %v1305, 1
        %v1540 = vpop.permute.xlu0 %1539
        %1541 = vrot.lane.b32.xlu0 %v1372, 1
        %v1542 = vpop.permute.xlu0 %1541
        %1543 = vrot.lane.b32.xlu0 %v1403, 1
        %v1544 = vpop.permute.xlu0 %1543
        %1545 = vrot.lane.b32.xlu0 %v1305, 127
        %v1546 = vpop.permute.xlu0 %1545
        %1547 = vrot.lane.b32.xlu0 %v1372, 127
        %v1548 = vpop.permute.xlu0 %1547
        %1549 = vrot.lane.b32.xlu0 %v1403, 127
        %v1550 = vpop.permute.xlu0 %1549
        %v1551 = vrot.slane %v1462, 2
        %v1552 = vrot.slane %v1464, 2
        %v1553 = vsel %vm1439, %v1551, %v1552
        %v1554 = vrot.slane %v1501, 2
        %v1555 = vsel %vm1439, %v1552, %v1554
        %v1556 = vrot.slane %v1509, 2
        %v1557 = vrot.slane %v1511, 2
        %v1558 = vsel %vm1439, %v1556, %v1557
        %v1559 = vrot.slane %v1513, 2
        %v1560 = vsel %vm1439, %v1557, %v1559
        %v1561 = vrot.slane %v1505, 2
        %v1562 = vrot.slane %v1507, 2
        %v1563 = vsel %vm1439, %v1561, %v1562
        %v1564 = vrot.slane %v1506, 2
        %v1565 = vsel %vm1439, %v1562, %v1564
        %v1566 = vrot.slane %v1515, 2
        %v1567 = vrot.slane %v1517, 2
        %v1568 = vsel %vm1439, %v1566, %v1567
        %v1569 = vrot.slane %v1519, 2
        %v1570 = vsel %vm1439, %v1567, %v1569
        %v1571 = vrot.slane %v1528, 2
        %v1572 = vrot.slane %v1530, 2
        %v1573 = vsel %vm1439, %v1571, %v1572
        %v1574 = vrot.slane %v1532, 2
        %v1575 = vsel %vm1439, %v1572, %v1574
        %v1576 = vrot.slane %v1522, 2
        %v1577 = vrot.slane %v1524, 2
        %v1578 = vsel %vm1439, %v1576, %v1577
        %v1579 = vrot.slane %v1526, 2
        %v1580 = vsel %vm1439, %v1577, %v1579
        %v1581 = vrot.slane %v1534, 2
        %v1582 = vrot.slane %v1536, 2
        %v1583 = vsel %vm1439, %v1581, %v1582
        %v1584 = vrot.slane %v1538, 2
        %v1585 = vsel %vm1439, %v1582, %v1584
        %v1586 = vrot.slane %v1540, 2
        %v1587 = vrot.slane %v1542, 2
        %v1588 = vsel %vm1439, %v1586, %v1587
        %v1589 = vrot.slane %v1544, 2
        %v1590 = vsel %vm1439, %v1587, %v1589
        %v1591 = vrot.slane %v1305, 2
        %v1592 = vrot.slane %v1372, 2
        %v1593 = vsel %vm1439, %v1591, %v1592
        %v1594 = vrot.slane %v1403, 2
        %v1595 = vsel %vm1439, %v1592, %v1594
        %v1596 = vrot.slane %v1546, 2
        %v1597 = vrot.slane %v1548, 2
        %v1598 = vsel %vm1439, %v1596, %v1597
        %v1599 = vrot.slane %v1550, 2
        %v1600 = vsel %vm1439, %v1597, %v1599
        %1601 = vrot.lane.b32.xlu0 %v1495, 127
        %v1602 = vpop.permute.xlu0 %1601
        %1603 = vrot.lane.b32.xlu0 %v1497, 127
        %v1604 = vpop.permute.xlu0 %1603
        %1605 = vrot.lane.b32.xlu0 %v1553, 127
        %v1606 = vpop.permute.xlu0 %1605
        %1607 = vrot.lane.b32.xlu0 %v1555, 127
        %v1608 = vpop.permute.xlu0 %1607
        %1609 = vrot.lane.b32.xlu0 %v1558, 127
        %v1610 = vpop.permute.xlu0 %1609
        %1611 = vrot.lane.b32.xlu0 %v1560, 127
        %v1612 = vpop.permute.xlu0 %1611
        %1613 = vrot.lane.b32.xlu0 %v1563, 127
        %v1614 = vpop.permute.xlu0 %1613
        %1615 = vrot.lane.b32.xlu0 %v1565, 127
        %v1616 = vpop.permute.xlu0 %1615
        %1617 = vrot.lane.b32.xlu0 %v1568, 127
        %v1618 = vpop.permute.xlu0 %1617
        %1619 = vrot.lane.b32.xlu0 %v1570, 127
        %v1620 = vpop.permute.xlu0 %1619
        %1621 = vrot.lane.b32.xlu0 %v1573, 127
        %v1622 = vpop.permute.xlu0 %1621
        %1623 = vrot.lane.b32.xlu0 %v1575, 127
        %v1624 = vpop.permute.xlu0 %1623
        %1625 = vrot.lane.b32.xlu0 %v1578, 127
        %v1626 = vpop.permute.xlu0 %1625
        %1627 = vrot.lane.b32.xlu0 %v1580, 127
        %v1628 = vpop.permute.xlu0 %1627
        %1629 = vrot.lane.b32.xlu0 %v1583, 127
        %v1630 = vpop.permute.xlu0 %1629
        %1631 = vrot.lane.b32.xlu0 %v1585, 127
        %v1632 = vpop.permute.xlu0 %1631
        %1633 = vrot.lane.b32.xlu0 %v1588, 127
        %v1634 = vpop.permute.xlu0 %1633
        %1635 = vrot.lane.b32.xlu0 %v1590, 127
        %v1636 = vpop.permute.xlu0 %1635
        %1637 = vrot.lane.b32.xlu0 %v1593, 127
        %v1638 = vpop.permute.xlu0 %1637
        %1639 = vrot.lane.b32.xlu0 %v1595, 127
        %v1640 = vpop.permute.xlu0 %1639
        %1641 = vrot.lane.b32.xlu0 %v1598, 127
        %v1642 = vpop.permute.xlu0 %1641
        %1643 = vrot.lane.b32.xlu0 %v1600, 127
        %v1644 = vpop.permute.xlu0 %1643
        %v1667 = vcombine.low %v1303, %v1413
        %v1668 = vcombine.high %v1303, %v1413
        %v1670 = vunpack.c.l.s4 1983009808
        %v1671 = vunpack.c.0.s8 %v1670
        %v1672 = vlaneseq
        %v1673 = vshrl.u32 %v1672, 7
        %v1674 = vsub.s32 %v1671, %v1673
        %v1675 = vrot.slane %v1667, %v1674
        %v1677 = vunpack.c.l.s4 1983009808
        %v1678 = vunpack.c.0.s8 %v1677
        %v1679 = vlaneseq
        %v1680 = vshrl.u32 %v1679, 7
        %v1681 = vsub.s32 %v1678, %v1680
        %v1682 = vrot.slane %v1668, %v1681
        %v1683 = vcombine.low %v1407, %v1422
        %v1684 = vcombine.high %v1407, %v1422
        %v1686 = vunpack.c.l.s4 1983009808
        %v1687 = vunpack.c.0.s8 %v1686
        %v1688 = vlaneseq
        %v1689 = vshrl.u32 %v1688, 7
        %v1690 = vsub.s32 %v1687, %v1689
        %v1691 = vrot.slane %v1683, %v1690
        %v1693 = vunpack.c.l.s4 1983009808
        %v1694 = vunpack.c.0.s8 %v1693
        %v1695 = vlaneseq
        %v1696 = vshrl.u32 %v1695, 7
        %v1697 = vsub.s32 %v1694, %v1696
        %v1698 = vrot.slane %v1684, %v1697
        %v1699 = vcombine.low %v1428, %v1442
        %v1700 = vcombine.high %v1428, %v1442
        %v1702 = vunpack.c.l.s4 1983009808
        %v1703 = vunpack.c.0.s8 %v1702
        %v1704 = vlaneseq
        %v1705 = vshrl.u32 %v1704, 7
        %v1706 = vsub.s32 %v1703, %v1705
        %v1707 = vrot.slane %v1699, %v1706
        %v1709 = vunpack.c.l.s4 1983009808
        %v1710 = vunpack.c.0.s8 %v1709
        %v1711 = vlaneseq
        %v1712 = vshrl.u32 %v1711, 7
        %v1713 = vsub.s32 %v1710, %v1712
        %v1714 = vrot.slane %v1700, %v1713
        %v1715 = vcombine.low %v1434, %v1448
        %v1716 = vcombine.high %v1434, %v1448
        %v1718 = vunpack.c.l.s4 1983009808
        %v1719 = vunpack.c.0.s8 %v1718
        %v1720 = vlaneseq
        %v1721 = vshrl.u32 %v1720, 7
        %v1722 = vsub.s32 %v1719, %v1721
        %v1723 = vrot.slane %v1715, %v1722
        %v1725 = vunpack.c.l.s4 1983009808
        %v1726 = vunpack.c.0.s8 %v1725
        %v1727 = vlaneseq
        %v1728 = vshrl.u32 %v1727, 7
        %v1729 = vsub.s32 %v1726, %v1728
        %v1730 = vrot.slane %v1716, %v1729
        %v1731 = vcombine.low %v1675, %v1691
        %v1732 = vcombine.high %v1675, %v1691
        %v1734 = vunpack.c.l.s4 1934713408
        %v1735 = vunpack.c.0.s8 %v1734
        %v1736 = vlaneseq
        %v1737 = vshrl.u32 %v1736, 7
        %v1738 = vsub.s32 %v1735, %v1737
        %v1739 = vrot.slane %v1731, %v1738
        %v1741 = vunpack.c.l.s4 1934713408
        %v1742 = vunpack.c.0.s8 %v1741
        %v1743 = vlaneseq
        %v1744 = vshrl.u32 %v1743, 7
        %v1745 = vsub.s32 %v1742, %v1744
        %v1746 = vrot.slane %v1732, %v1745
        %v1747 = vcombine.low %v1682, %v1698
        %v1748 = vcombine.high %v1682, %v1698
        %v1750 = vunpack.c.l.s4 1934713408
        %v1751 = vunpack.c.0.s8 %v1750
        %v1752 = vlaneseq
        %v1753 = vshrl.u32 %v1752, 7
        %v1754 = vsub.s32 %v1751, %v1753
        %v1755 = vrot.slane %v1747, %v1754
        %v1757 = vunpack.c.l.s4 1934713408
        %v1758 = vunpack.c.0.s8 %v1757
        %v1759 = vlaneseq
        %v1760 = vshrl.u32 %v1759, 7
        %v1761 = vsub.s32 %v1758, %v1760
        %v1762 = vrot.slane %v1748, %v1761
        %v1763 = vcombine.low %v1707, %v1723
        %v1764 = vcombine.high %v1707, %v1723
        %v1766 = vunpack.c.l.s4 1934713408
        %v1767 = vunpack.c.0.s8 %v1766
        %v1768 = vlaneseq
        %v1769 = vshrl.u32 %v1768, 7
        %v1770 = vsub.s32 %v1767, %v1769
        %v1771 = vrot.slane %v1763, %v1770
        %v1773 = vunpack.c.l.s4 1934713408
        %v1774 = vunpack.c.0.s8 %v1773
        %v1775 = vlaneseq
        %v1776 = vshrl.u32 %v1775, 7
        %v1777 = vsub.s32 %v1774, %v1776
        %v1778 = vrot.slane %v1764, %v1777
        %v1779 = vcombine.low %v1714, %v1730
        %v1780 = vcombine.high %v1714, %v1730
        %v1782 = vunpack.c.l.s4 1934713408
        %v1783 = vunpack.c.0.s8 %v1782
        %v1784 = vlaneseq
        %v1785 = vshrl.u32 %v1784, 7
        %v1786 = vsub.s32 %v1783, %v1785
        %v1787 = vrot.slane %v1779, %v1786
        %v1789 = vunpack.c.l.s4 1934713408
        %v1790 = vunpack.c.0.s8 %v1789
        %v1791 = vlaneseq
        %v1792 = vshrl.u32 %v1791, 7
        %v1793 = vsub.s32 %v1790, %v1792
        %v1794 = vrot.slane %v1780, %v1793
        %v1795 = vcombine.low %v1739, %v1771
        %v1796 = vcombine.high %v1739, %v1771
        %v1797 = vcombine.low %v1746, %v1778
        %v1798 = vcombine.high %v1746, %v1778
        %v1799 = vcombine.low %v1755, %v1787
        %v1800 = vcombine.high %v1755, %v1787
        %v1801 = vcombine.low %v1762, %v1794
        %v1802 = vcombine.high %v1762, %v1794
        %v1803 = vcombine.low %v1454, %v1462
        %v1804 = vcombine.high %v1454, %v1462
        %v1806 = vunpack.c.l.s4 1983009808
        %v1807 = vunpack.c.0.s8 %v1806
        %v1808 = vlaneseq
        %v1809 = vshrl.u32 %v1808, 7
        %v1810 = vsub.s32 %v1807, %v1809
        %v1811 = vrot.slane %v1803, %v1810
        %v1813 = vunpack.c.l.s4 1983009808
        %v1814 = vunpack.c.0.s8 %v1813
        %v1815 = vlaneseq
        %v1816 = vshrl.u32 %v1815, 7
        %v1817 = vsub.s32 %v1814, %v1816
        %v1818 = vrot.slane %v1804, %v1817
        %v1819 = vcombine.low %v1304, %v1468
        %v1820 = vcombine.high %v1304, %v1468
        %v1822 = vunpack.c.l.s4 1983009808
        %v1823 = vunpack.c.0.s8 %v1822
        %v1824 = vlaneseq
        %v1825 = vshrl.u32 %v1824, 7
        %v1826 = vsub.s32 %v1823, %v1825
        %v1827 = vrot.slane %v1819, %v1826
        %v1829 = vunpack.c.l.s4 1983009808
        %v1830 = vunpack.c.0.s8 %v1829
        %v1831 = vlaneseq
        %v1832 = vshrl.u32 %v1831, 7
        %v1833 = vsub.s32 %v1830, %v1832
        %v1834 = vrot.slane %v1820, %v1833
        %v1835 = vcombine.low %v1476, %v1488
        %v1836 = vcombine.high %v1476, %v1488
        %v1838 = vunpack.c.l.s4 1983009808
        %v1839 = vunpack.c.0.s8 %v1838
        %v1840 = vlaneseq
        %v1841 = vshrl.u32 %v1840, 7
        %v1842 = vsub.s32 %v1839, %v1841
        %v1843 = vrot.slane %v1835, %v1842
        %v1845 = vunpack.c.l.s4 1983009808
        %v1846 = vunpack.c.0.s8 %v1845
        %v1847 = vlaneseq
        %v1848 = vshrl.u32 %v1847, 7
        %v1849 = vsub.s32 %v1846, %v1848
        %v1850 = vrot.slane %v1836, %v1849
        %v1851 = vcombine.low %v1482, %v1495
        %v1852 = vcombine.high %v1482, %v1495
        %v1854 = vunpack.c.l.s4 1983009808
        %v1855 = vunpack.c.0.s8 %v1854
        %v1856 = vlaneseq
        %v1857 = vshrl.u32 %v1856, 7
        %v1858 = vsub.s32 %v1855, %v1857
        %v1859 = vrot.slane %v1851, %v1858
        %v1861 = vunpack.c.l.s4 1983009808
        %v1862 = vunpack.c.0.s8 %v1861
        %v1863 = vlaneseq
        %v1864 = vshrl.u32 %v1863, 7
        %v1865 = vsub.s32 %v1862, %v1864
        %v1866 = vrot.slane %v1852, %v1865
        %v1867 = vcombine.low %v1811, %v1827
        %v1868 = vcombine.high %v1811, %v1827
        %v1870 = vunpack.c.l.s4 1934713408
        %v1871 = vunpack.c.0.s8 %v1870
        %v1872 = vlaneseq
        %v1873 = vshrl.u32 %v1872, 7
        %v1874 = vsub.s32 %v1871, %v1873
        %v1875 = vrot.slane %v1867, %v1874
        %v1877 = vunpack.c.l.s4 1934713408
        %v1878 = vunpack.c.0.s8 %v1877
        %v1879 = vlaneseq
        %v1880 = vshrl.u32 %v1879, 7
        %v1881 = vsub.s32 %v1878, %v1880
        %v1882 = vrot.slane %v1868, %v1881
        %v1883 = vcombine.low %v1818, %v1834
        %v1884 = vcombine.high %v1818, %v1834
        %v1886 = vunpack.c.l.s4 1934713408
        %v1887 = vunpack.c.0.s8 %v1886
        %v1888 = vlaneseq
        %v1889 = vshrl.u32 %v1888, 7
        %v1890 = vsub.s32 %v1887, %v1889
        %v1891 = vrot.slane %v1883, %v1890
        %v1893 = vunpack.c.l.s4 1934713408
        %v1894 = vunpack.c.0.s8 %v1893
        %v1895 = vlaneseq
        %v1896 = vshrl.u32 %v1895, 7
        %v1897 = vsub.s32 %v1894, %v1896
        %v1898 = vrot.slane %v1884, %v1897
        %v1899 = vcombine.low %v1843, %v1859
        %v1900 = vcombine.high %v1843, %v1859
        %v1902 = vunpack.c.l.s4 1934713408
        %v1903 = vunpack.c.0.s8 %v1902
        %v1904 = vlaneseq
        %v1905 = vshrl.u32 %v1904, 7
        %v1906 = vsub.s32 %v1903, %v1905
        %v1907 = vrot.slane %v1899, %v1906
        %v1909 = vunpack.c.l.s4 1934713408
        %v1910 = vunpack.c.0.s8 %v1909
        %v1911 = vlaneseq
        %v1912 = vshrl.u32 %v1911, 7
        %v1913 = vsub.s32 %v1910, %v1912
        %v1914 = vrot.slane %v1900, %v1913
        %v1915 = vcombine.low %v1850, %v1866
        %v1916 = vcombine.high %v1850, %v1866
        %v1918 = vunpack.c.l.s4 1934713408
        %v1919 = vunpack.c.0.s8 %v1918
        %v1920 = vlaneseq
        %v1921 = vshrl.u32 %v1920, 7
        %v1922 = vsub.s32 %v1919, %v1921
        %v1923 = vrot.slane %v1915, %v1922
        %v1925 = vunpack.c.l.s4 1934713408
        %v1926 = vunpack.c.0.s8 %v1925
        %v1927 = vlaneseq
        %v1928 = vshrl.u32 %v1927, 7
        %v1929 = vsub.s32 %v1926, %v1928
        %v1930 = vrot.slane %v1916, %v1929
        %v1931 = vcombine.low %v1875, %v1907
        %v1932 = vcombine.high %v1875, %v1907
        %v1933 = vcombine.low %v1882, %v1914
        %v1934 = vcombine.high %v1882, %v1914
        %v1935 = vcombine.low %v1891, %v1923
        %v1936 = vcombine.high %v1891, %v1923
        %v1937 = vcombine.low %v1898, %v1930
        %v1938 = vcombine.high %v1898, %v1930
        %v1939 = vcombine.low %v1602, %v1610
        %v1940 = vcombine.high %v1602, %v1610
        %v1942 = vunpack.c.l.s4 1983009808
        %v1943 = vunpack.c.0.s8 %v1942
        %v1944 = vlaneseq
        %v1945 = vshrl.u32 %v1944, 7
        %v1946 = vsub.s32 %v1943, %v1945
        %v1947 = vrot.slane %v1939, %v1946
        %v1949 = vunpack.c.l.s4 1983009808
        %v1950 = vunpack.c.0.s8 %v1949
        %v1951 = vlaneseq
        %v1952 = vshrl.u32 %v1951, 7
        %v1953 = vsub.s32 %v1950, %v1952
        %v1954 = vrot.slane %v1940, %v1953
        %v1955 = vcombine.low %v1606, %v1614
        %v1956 = vcombine.high %v1606, %v1614
        %v1958 = vunpack.c.l.s4 1983009808
        %v1959 = vunpack.c.0.s8 %v1958
        %v1960 = vlaneseq
        %v1961 = vshrl.u32 %v1960, 7
        %v1962 = vsub.s32 %v1959, %v1961
        %v1963 = vrot.slane %v1955, %v1962
        %v1965 = vunpack.c.l.s4 1983009808
        %v1966 = vunpack.c.0.s8 %v1965
        %v1967 = vlaneseq
        %v1968 = vshrl.u32 %v1967, 7
        %v1969 = vsub.s32 %v1966, %v1968
        %v1970 = vrot.slane %v1956, %v1969
        %v1971 = vcombine.low %v1618, %v1626
        %v1972 = vcombine.high %v1618, %v1626
        %v1974 = vunpack.c.l.s4 1983009808
        %v1975 = vunpack.c.0.s8 %v1974
        %v1976 = vlaneseq
        %v1977 = vshrl.u32 %v1976, 7
        %v1978 = vsub.s32 %v1975, %v1977
        %v1979 = vrot.slane %v1971, %v1978
        %v1981 = vunpack.c.l.s4 1983009808
        %v1982 = vunpack.c.0.s8 %v1981
        %v1983 = vlaneseq
        %v1984 = vshrl.u32 %v1983, 7
        %v1985 = vsub.s32 %v1982, %v1984
        %v1986 = vrot.slane %v1972, %v1985
        %v1987 = vcombine.low %v1622, %v1630
        %v1988 = vcombine.high %v1622, %v1630
        %v1990 = vunpack.c.l.s4 1983009808
        %v1991 = vunpack.c.0.s8 %v1990
        %v1992 = vlaneseq
        %v1993 = vshrl.u32 %v1992, 7
        %v1994 = vsub.s32 %v1991, %v1993
        %v1995 = vrot.slane %v1987, %v1994
        %v1997 = vunpack.c.l.s4 1983009808
        %v1998 = vunpack.c.0.s8 %v1997
        %v1999 = vlaneseq
        %v2000 = vshrl.u32 %v1999, 7
        %v2001 = vsub.s32 %v1998, %v2000
        %v2002 = vrot.slane %v1988, %v2001
        %v2003 = vcombine.low %v1947, %v1963
        %v2004 = vcombine.high %v1947, %v1963
        %v2006 = vunpack.c.l.s4 1934713408
        %v2007 = vunpack.c.0.s8 %v2006
        %v2008 = vlaneseq
        %v2009 = vshrl.u32 %v2008, 7
        %v2010 = vsub.s32 %v2007, %v2009
        %v2011 = vrot.slane %v2003, %v2010
        %v2013 = vunpack.c.l.s4 1934713408
        %v2014 = vunpack.c.0.s8 %v2013
        %v2015 = vlaneseq
        %v2016 = vshrl.u32 %v2015, 7
        %v2017 = vsub.s32 %v2014, %v2016
        %v2018 = vrot.slane %v2004, %v2017
        %v2019 = vcombine.low %v1954, %v1970
        %v2020 = vcombine.high %v1954, %v1970
        %v2022 = vunpack.c.l.s4 1934713408
        %v2023 = vunpack.c.0.s8 %v2022
        %v2024 = vlaneseq
        %v2025 = vshrl.u32 %v2024, 7
        %v2026 = vsub.s32 %v2023, %v2025
        %v2027 = vrot.slane %v2019, %v2026
        %v2029 = vunpack.c.l.s4 1934713408
        %v2030 = vunpack.c.0.s8 %v2029
        %v2031 = vlaneseq
        %v2032 = vshrl.u32 %v2031, 7
        %v2033 = vsub.s32 %v2030, %v2032
        %v2034 = vrot.slane %v2020, %v2033
        %v2035 = vcombine.low %v1979, %v1995
        %v2036 = vcombine.high %v1979, %v1995
        %v2038 = vunpack.c.l.s4 1934713408
        %v2039 = vunpack.c.0.s8 %v2038
        %v2040 = vlaneseq
        %v2041 = vshrl.u32 %v2040, 7
        %v2042 = vsub.s32 %v2039, %v2041
        %v2043 = vrot.slane %v2035, %v2042
        %v2045 = vunpack.c.l.s4 1934713408
        %v2046 = vunpack.c.0.s8 %v2045
        %v2047 = vlaneseq
        %v2048 = vshrl.u32 %v2047, 7
        %v2049 = vsub.s32 %v2046, %v2048
        %v2050 = vrot.slane %v2036, %v2049
        %v2051 = vcombine.low %v1986, %v2002
        %v2052 = vcombine.high %v1986, %v2002
        %v2054 = vunpack.c.l.s4 1934713408
        %v2055 = vunpack.c.0.s8 %v2054
        %v2056 = vlaneseq
        %v2057 = vshrl.u32 %v2056, 7
        %v2058 = vsub.s32 %v2055, %v2057
        %v2059 = vrot.slane %v2051, %v2058
        %v2061 = vunpack.c.l.s4 1934713408
        %v2062 = vunpack.c.0.s8 %v2061
        %v2063 = vlaneseq
        %v2064 = vshrl.u32 %v2063, 7
        %v2065 = vsub.s32 %v2062, %v2064
        %v2066 = vrot.slane %v2052, %v2065
        %v2067 = vcombine.low %v2011, %v2043
        %v2068 = vcombine.high %v2011, %v2043
        %v2069 = vcombine.low %v2018, %v2050
        %v2070 = vcombine.high %v2018, %v2050
        %v2071 = vcombine.low %v2027, %v2059
        %v2072 = vcombine.high %v2027, %v2059
        %v2073 = vcombine.low %v2034, %v2066
        %v2074 = vcombine.high %v2034, %v2066
        %v2075 = vcombine.low %v1634, %v1642
        %v2076 = vcombine.high %v1634, %v1642
        %v2078 = vunpack.c.l.s4 1983009808
        %v2079 = vunpack.c.0.s8 %v2078
        %v2080 = vlaneseq
        %v2081 = vshrl.u32 %v2080, 7
        %v2082 = vsub.s32 %v2079, %v2081
        %v2083 = vrot.slane %v2075, %v2082
        %v2085 = vunpack.c.l.s4 1983009808
        %v2086 = vunpack.c.0.s8 %v2085
        %v2087 = vlaneseq
        %v2088 = vshrl.u32 %v2087, 7
        %v2089 = vsub.s32 %v2086, %v2088
        %v2090 = vrot.slane %v2076, %v2089
        %v2091 = vcombine.high %v1638, 0.0
        %v2093 = vunpack.c.l.s4 1983009808
        %v2094 = vunpack.c.0.s8 %v2093
        %v2095 = vlaneseq
        %v2096 = vshrl.u32 %v2095, 7
        %v2097 = vsub.s32 %v2094, %v2096
        %v2098 = vrot.slane %v1638, %v2097
        %v2100 = vunpack.c.l.s4 1983009808
        %v2101 = vunpack.c.0.s8 %v2100
        %v2102 = vlaneseq
        %v2103 = vshrl.u32 %v2102, 7
        %v2104 = vsub.s32 %v2101, %v2103
        %v2105 = vrot.slane %v2091, %v2104
        %v2106 = vcombine.low %v2083, %v2098
        %v2107 = vcombine.high %v2083, %v2098
        %v2109 = vunpack.c.l.s4 1934713408
        %v2110 = vunpack.c.0.s8 %v2109
        %v2111 = vlaneseq
        %v2112 = vshrl.u32 %v2111, 7
        %v2113 = vsub.s32 %v2110, %v2112
        %v2114 = vrot.slane %v2106, %v2113
        %v2116 = vunpack.c.l.s4 1934713408
        %v2117 = vunpack.c.0.s8 %v2116
        %v2118 = vlaneseq
        %v2119 = vshrl.u32 %v2118, 7
        %v2120 = vsub.s32 %v2117, %v2119
        %v2121 = vrot.slane %v2107, %v2120
        %v2122 = vcombine.low %v2090, %v2105
        %v2123 = vcombine.high %v2090, %v2105
        %v2125 = vunpack.c.l.s4 1934713408
        %v2126 = vunpack.c.0.s8 %v2125
        %v2127 = vlaneseq
        %v2128 = vshrl.u32 %v2127, 7
        %v2129 = vsub.s32 %v2126, %v2128
        %v2130 = vrot.slane %v2122, %v2129
        %v2132 = vunpack.c.l.s4 1934713408
        %v2133 = vunpack.c.0.s8 %v2132
        %v2134 = vlaneseq
        %v2135 = vshrl.u32 %v2134, 7
        %v2136 = vsub.s32 %v2133, %v2135
        %v2137 = vrot.slane %v2123, %v2136
        %v2138 = vcombine.high %v2114, 0.0
        %v2139 = vcombine.high %v2121, 0.0
        %v2140 = vcombine.high %v2130, 0.0
        %v2141 = vcombine.high %v2137, 0.0
        %v2142 = vcombine.low %v1370, %v1415
        %v2143 = vcombine.high %v1370, %v1415
        %v2145 = vunpack.c.l.s4 1983009808
        %v2146 = vunpack.c.0.s8 %v2145
        %v2147 = vlaneseq
        %v2148 = vshrl.u32 %v2147, 7
        %v2149 = vsub.s32 %v2146, %v2148
        %v2150 = vrot.slane %v2142, %v2149
        %v2152 = vunpack.c.l.s4 1983009808
        %v2153 = vunpack.c.0.s8 %v2152
        %v2154 = vlaneseq
        %v2155 = vshrl.u32 %v2154, 7
        %v2156 = vsub.s32 %v2153, %v2155
        %v2157 = vrot.slane %v2143, %v2156
        %v2158 = vcombine.low %v1409, %v1424
        %v2159 = vcombine.high %v1409, %v1424
        %v2161 = vunpack.c.l.s4 1983009808
        %v2162 = vunpack.c.0.s8 %v2161
        %v2163 = vlaneseq
        %v2164 = vshrl.u32 %v2163, 7
        %v2165 = vsub.s32 %v2162, %v2164
        %v2166 = vrot.slane %v2158, %v2165
        %v2168 = vunpack.c.l.s4 1983009808
        %v2169 = vunpack.c.0.s8 %v2168
        %v2170 = vlaneseq
        %v2171 = vshrl.u32 %v2170, 7
        %v2172 = vsub.s32 %v2169, %v2171
        %v2173 = vrot.slane %v2159, %v2172
        %v2174 = vcombine.low %v1430, %v1444
        %v2175 = vcombine.high %v1430, %v1444
        %v2177 = vunpack.c.l.s4 1983009808
        %v2178 = vunpack.c.0.s8 %v2177
        %v2179 = vlaneseq
        %v2180 = vshrl.u32 %v2179, 7
        %v2181 = vsub.s32 %v2178, %v2180
        %v2182 = vrot.slane %v2174, %v2181
        %v2184 = vunpack.c.l.s4 1983009808
        %v2185 = vunpack.c.0.s8 %v2184
        %v2186 = vlaneseq
        %v2187 = vshrl.u32 %v2186, 7
        %v2188 = vsub.s32 %v2185, %v2187
        %v2189 = vrot.slane %v2175, %v2188
        %v2190 = vcombine.low %v1436, %v1450
        %v2191 = vcombine.high %v1436, %v1450
        %v2193 = vunpack.c.l.s4 1983009808
        %v2194 = vunpack.c.0.s8 %v2193
        %v2195 = vlaneseq
        %v2196 = vshrl.u32 %v2195, 7
        %v2197 = vsub.s32 %v2194, %v2196
        %v2198 = vrot.slane %v2190, %v2197
        %v2200 = vunpack.c.l.s4 1983009808
        %v2201 = vunpack.c.0.s8 %v2200
        %v2202 = vlaneseq
        %v2203 = vshrl.u32 %v2202, 7
        %v2204 = vsub.s32 %v2201, %v2203
        %v2205 = vrot.slane %v2191, %v2204
        %v2206 = vcombine.low %v2150, %v2166
        %v2207 = vcombine.high %v2150, %v2166
        %v2209 = vunpack.c.l.s4 1934713408
        %v2210 = vunpack.c.0.s8 %v2209
        %v2211 = vlaneseq
        %v2212 = vshrl.u32 %v2211, 7
        %v2213 = vsub.s32 %v2210, %v2212
        %v2214 = vrot.slane %v2206, %v2213
        %v2216 = vunpack.c.l.s4 1934713408
        %v2217 = vunpack.c.0.s8 %v2216
        %v2218 = vlaneseq
        %v2219 = vshrl.u32 %v2218, 7
        %v2220 = vsub.s32 %v2217, %v2219
        %v2221 = vrot.slane %v2207, %v2220
        %v2222 = vcombine.low %v2157, %v2173
        %v2223 = vcombine.high %v2157, %v2173
        %v2225 = vunpack.c.l.s4 1934713408
        %v2226 = vunpack.c.0.s8 %v2225
        %v2227 = vlaneseq
        %v2228 = vshrl.u32 %v2227, 7
        %v2229 = vsub.s32 %v2226, %v2228
        %v2230 = vrot.slane %v2222, %v2229
        %v2232 = vunpack.c.l.s4 1934713408
        %v2233 = vunpack.c.0.s8 %v2232
        %v2234 = vlaneseq
        %v2235 = vshrl.u32 %v2234, 7
        %v2236 = vsub.s32 %v2233, %v2235
        %v2237 = vrot.slane %v2223, %v2236
        %v2238 = vcombine.low %v2182, %v2198
        %v2239 = vcombine.high %v2182, %v2198
        %v2241 = vunpack.c.l.s4 1934713408
        %v2242 = vunpack.c.0.s8 %v2241
        %v2243 = vlaneseq
        %v2244 = vshrl.u32 %v2243, 7
        %v2245 = vsub.s32 %v2242, %v2244
        %v2246 = vrot.slane %v2238, %v2245
        %v2248 = vunpack.c.l.s4 1934713408
        %v2249 = vunpack.c.0.s8 %v2248
        %v2250 = vlaneseq
        %v2251 = vshrl.u32 %v2250, 7
        %v2252 = vsub.s32 %v2249, %v2251
        %v2253 = vrot.slane %v2239, %v2252
        %v2254 = vcombine.low %v2189, %v2205
        %v2255 = vcombine.high %v2189, %v2205
        %v2257 = vunpack.c.l.s4 1934713408
        %v2258 = vunpack.c.0.s8 %v2257
        %v2259 = vlaneseq
        %v2260 = vshrl.u32 %v2259, 7
        %v2261 = vsub.s32 %v2258, %v2260
        %v2262 = vrot.slane %v2254, %v2261
        %v2264 = vunpack.c.l.s4 1934713408
        %v2265 = vunpack.c.0.s8 %v2264
        %v2266 = vlaneseq
        %v2267 = vshrl.u32 %v2266, 7
        %v2268 = vsub.s32 %v2265, %v2267
        %v2269 = vrot.slane %v2255, %v2268
        %v2270 = vcombine.low %v2214, %v2246
        %v2271 = vcombine.high %v2214, %v2246
        %v2272 = vcombine.low %v2221, %v2253
        %v2273 = vcombine.high %v2221, %v2253
        %v2274 = vcombine.low %v2230, %v2262
        %v2275 = vcombine.high %v2230, %v2262
        %v2276 = vcombine.low %v2237, %v2269
        %v2277 = vcombine.high %v2237, %v2269
        %v2278 = vcombine.low %v1456, %v1464
        %v2279 = vcombine.high %v1456, %v1464
        %v2281 = vunpack.c.l.s4 1983009808
        %v2282 = vunpack.c.0.s8 %v2281
        %v2283 = vlaneseq
        %v2284 = vshrl.u32 %v2283, 7
        %v2285 = vsub.s32 %v2282, %v2284
        %v2286 = vrot.slane %v2278, %v2285
        %v2288 = vunpack.c.l.s4 1983009808
        %v2289 = vunpack.c.0.s8 %v2288
        %v2290 = vlaneseq
        %v2291 = vshrl.u32 %v2290, 7
        %v2292 = vsub.s32 %v2289, %v2291
        %v2293 = vrot.slane %v2279, %v2292
        %v2294 = vcombine.low %v1371, %v1470
        %v2295 = vcombine.high %v1371, %v1470
        %v2297 = vunpack.c.l.s4 1983009808
        %v2298 = vunpack.c.0.s8 %v2297
        %v2299 = vlaneseq
        %v2300 = vshrl.u32 %v2299, 7
        %v2301 = vsub.s32 %v2298, %v2300
        %v2302 = vrot.slane %v2294, %v2301
        %v2304 = vunpack.c.l.s4 1983009808
        %v2305 = vunpack.c.0.s8 %v2304
        %v2306 = vlaneseq
        %v2307 = vshrl.u32 %v2306, 7
        %v2308 = vsub.s32 %v2305, %v2307
        %v2309 = vrot.slane %v2295, %v2308
        %v2310 = vcombine.low %v1478, %v1490
        %v2311 = vcombine.high %v1478, %v1490
        %v2313 = vunpack.c.l.s4 1983009808
        %v2314 = vunpack.c.0.s8 %v2313
        %v2315 = vlaneseq
        %v2316 = vshrl.u32 %v2315, 7
        %v2317 = vsub.s32 %v2314, %v2316
        %v2318 = vrot.slane %v2310, %v2317
        %v2320 = vunpack.c.l.s4 1983009808
        %v2321 = vunpack.c.0.s8 %v2320
        %v2322 = vlaneseq
        %v2323 = vshrl.u32 %v2322, 7
        %v2324 = vsub.s32 %v2321, %v2323
        %v2325 = vrot.slane %v2311, %v2324
        %v2326 = vcombine.low %v1484, %v1497
        %v2327 = vcombine.high %v1484, %v1497
        %v2329 = vunpack.c.l.s4 1983009808
        %v2330 = vunpack.c.0.s8 %v2329
        %v2331 = vlaneseq
        %v2332 = vshrl.u32 %v2331, 7
        %v2333 = vsub.s32 %v2330, %v2332
        %v2334 = vrot.slane %v2326, %v2333
        %v2336 = vunpack.c.l.s4 1983009808
        %v2337 = vunpack.c.0.s8 %v2336
        %v2338 = vlaneseq
        %v2339 = vshrl.u32 %v2338, 7
        %v2340 = vsub.s32 %v2337, %v2339
        %v2341 = vrot.slane %v2327, %v2340
        %v2342 = vcombine.low %v2286, %v2302
        %v2343 = vcombine.high %v2286, %v2302
        %v2345 = vunpack.c.l.s4 1934713408
        %v2346 = vunpack.c.0.s8 %v2345
        %v2347 = vlaneseq
        %v2348 = vshrl.u32 %v2347, 7
        %v2349 = vsub.s32 %v2346, %v2348
        %v2350 = vrot.slane %v2342, %v2349
        %v2352 = vunpack.c.l.s4 1934713408
        %v2353 = vunpack.c.0.s8 %v2352
        %v2354 = vlaneseq
        %v2355 = vshrl.u32 %v2354, 7
        %v2356 = vsub.s32 %v2353, %v2355
        %v2357 = vrot.slane %v2343, %v2356
        %v2358 = vcombine.low %v2293, %v2309
        %v2359 = vcombine.high %v2293, %v2309
        %v2361 = vunpack.c.l.s4 1934713408
        %v2362 = vunpack.c.0.s8 %v2361
        %v2363 = vlaneseq
        %v2364 = vshrl.u32 %v2363, 7
        %v2365 = vsub.s32 %v2362, %v2364
        %v2366 = vrot.slane %v2358, %v2365
        %v2368 = vunpack.c.l.s4 1934713408
        %v2369 = vunpack.c.0.s8 %v2368
        %v2370 = vlaneseq
        %v2371 = vshrl.u32 %v2370, 7
        %v2372 = vsub.s32 %v2369, %v2371
        %v2373 = vrot.slane %v2359, %v2372
        %v2374 = vcombine.low %v2318, %v2334
        %v2375 = vcombine.high %v2318, %v2334
        %v2377 = vunpack.c.l.s4 1934713408
        %v2378 = vunpack.c.0.s8 %v2377
        %v2379 = vlaneseq
        %v2380 = vshrl.u32 %v2379, 7
        %v2381 = vsub.s32 %v2378, %v2380
        %v2382 = vrot.slane %v2374, %v2381
        %v2384 = vunpack.c.l.s4 1934713408
        %v2385 = vunpack.c.0.s8 %v2384
        %v2386 = vlaneseq
        %v2387 = vshrl.u32 %v2386, 7
        %v2388 = vsub.s32 %v2385, %v2387
        %v2389 = vrot.slane %v2375, %v2388
        %v2390 = vcombine.low %v2325, %v2341
        %v2391 = vcombine.high %v2325, %v2341
        %v2393 = vunpack.c.l.s4 1934713408
        %v2394 = vunpack.c.0.s8 %v2393
        %v2395 = vlaneseq
        %v2396 = vshrl.u32 %v2395, 7
        %v2397 = vsub.s32 %v2394, %v2396
        %v2398 = vrot.slane %v2390, %v2397
        %v2400 = vunpack.c.l.s4 1934713408
        %v2401 = vunpack.c.0.s8 %v2400
        %v2402 = vlaneseq
        %v2403 = vshrl.u32 %v2402, 7
        %v2404 = vsub.s32 %v2401, %v2403
        %v2405 = vrot.slane %v2391, %v2404
        %v2406 = vcombine.low %v2350, %v2382
        %v2407 = vcombine.high %v2350, %v2382
        %v2408 = vcombine.low %v2357, %v2389
        %v2409 = vcombine.high %v2357, %v2389
        %v2410 = vcombine.low %v2366, %v2398
        %v2411 = vcombine.high %v2366, %v2398
        %v2412 = vcombine.low %v2373, %v2405
        %v2413 = vcombine.high %v2373, %v2405
        %v2414 = vcombine.low %v1604, %v1612
        %v2415 = vcombine.high %v1604, %v1612
        %v2417 = vunpack.c.l.s4 1983009808
        %v2418 = vunpack.c.0.s8 %v2417
        %v2419 = vlaneseq
        %v2420 = vshrl.u32 %v2419, 7
        %v2421 = vsub.s32 %v2418, %v2420
        %v2422 = vrot.slane %v2414, %v2421
        %v2424 = vunpack.c.l.s4 1983009808
        %v2425 = vunpack.c.0.s8 %v2424
        %v2426 = vlaneseq
        %v2427 = vshrl.u32 %v2426, 7
        %v2428 = vsub.s32 %v2425, %v2427
        %v2429 = vrot.slane %v2415, %v2428
        %v2430 = vcombine.low %v1608, %v1616
        %v2431 = vcombine.high %v1608, %v1616
        %v2433 = vunpack.c.l.s4 1983009808
        %v2434 = vunpack.c.0.s8 %v2433
        %v2435 = vlaneseq
        %v2436 = vshrl.u32 %v2435, 7
        %v2437 = vsub.s32 %v2434, %v2436
        %v2438 = vrot.slane %v2430, %v2437
        %v2440 = vunpack.c.l.s4 1983009808
        %v2441 = vunpack.c.0.s8 %v2440
        %v2442 = vlaneseq
        %v2443 = vshrl.u32 %v2442, 7
        %v2444 = vsub.s32 %v2441, %v2443
        %v2445 = vrot.slane %v2431, %v2444
        %v2446 = vcombine.low %v1620, %v1628
        %v2447 = vcombine.high %v1620, %v1628
        %v2449 = vunpack.c.l.s4 1983009808
        %v2450 = vunpack.c.0.s8 %v2449
        %v2451 = vlaneseq
        %v2452 = vshrl.u32 %v2451, 7
        %v2453 = vsub.s32 %v2450, %v2452
        %v2454 = vrot.slane %v2446, %v2453
        %v2456 = vunpack.c.l.s4 1983009808
        %v2457 = vunpack.c.0.s8 %v2456
        %v2458 = vlaneseq
        %v2459 = vshrl.u32 %v2458, 7
        %v2460 = vsub.s32 %v2457, %v2459
        %v2461 = vrot.slane %v2447, %v2460
        %v2462 = vcombine.low %v1624, %v1632
        %v2463 = vcombine.high %v1624, %v1632
        %v2465 = vunpack.c.l.s4 1983009808
        %v2466 = vunpack.c.0.s8 %v2465
        %v2467 = vlaneseq
        %v2468 = vshrl.u32 %v2467, 7
        %v2469 = vsub.s32 %v2466, %v2468
        %v2470 = vrot.slane %v2462, %v2469
        %v2472 = vunpack.c.l.s4 1983009808
        %v2473 = vunpack.c.0.s8 %v2472
        %v2474 = vlaneseq
        %v2475 = vshrl.u32 %v2474, 7
        %v2476 = vsub.s32 %v2473, %v2475
        %v2477 = vrot.slane %v2463, %v2476
        %v2478 = vcombine.low %v2422, %v2438
        %v2479 = vcombine.high %v2422, %v2438
        %v2481 = vunpack.c.l.s4 1934713408
        %v2482 = vunpack.c.0.s8 %v2481
        %v2483 = vlaneseq
        %v2484 = vshrl.u32 %v2483, 7
        %v2485 = vsub.s32 %v2482, %v2484
        %v2486 = vrot.slane %v2478, %v2485
        %v2488 = vunpack.c.l.s4 1934713408
        %v2489 = vunpack.c.0.s8 %v2488
        %v2490 = vlaneseq
        %v2491 = vshrl.u32 %v2490, 7
        %v2492 = vsub.s32 %v2489, %v2491
        %v2493 = vrot.slane %v2479, %v2492
        %v2494 = vcombine.low %v2429, %v2445
        %v2495 = vcombine.high %v2429, %v2445
        %v2497 = vunpack.c.l.s4 1934713408
        %v2498 = vunpack.c.0.s8 %v2497
        %v2499 = vlaneseq
        %v2500 = vshrl.u32 %v2499, 7
        %v2501 = vsub.s32 %v2498, %v2500
        %v2502 = vrot.slane %v2494, %v2501
        %v2504 = vunpack.c.l.s4 1934713408
        %v2505 = vunpack.c.0.s8 %v2504
        %v2506 = vlaneseq
        %v2507 = vshrl.u32 %v2506, 7
        %v2508 = vsub.s32 %v2505, %v2507
        %v2509 = vrot.slane %v2495, %v2508
        %v2510 = vcombine.low %v2454, %v2470
        %v2511 = vcombine.high %v2454, %v2470
        %v2513 = vunpack.c.l.s4 1934713408
        %v2514 = vunpack.c.0.s8 %v2513
        %v2515 = vlaneseq
        %v2516 = vshrl.u32 %v2515, 7
        %v2517 = vsub.s32 %v2514, %v2516
        %v2518 = vrot.slane %v2510, %v2517
        %v2520 = vunpack.c.l.s4 1934713408
        %v2521 = vunpack.c.0.s8 %v2520
        %v2522 = vlaneseq
        %v2523 = vshrl.u32 %v2522, 7
        %v2524 = vsub.s32 %v2521, %v2523
        %v2525 = vrot.slane %v2511, %v2524
        %v2526 = vcombine.low %v2461, %v2477
        %v2527 = vcombine.high %v2461, %v2477
        %v2529 = vunpack.c.l.s4 1934713408
        %v2530 = vunpack.c.0.s8 %v2529
        %v2531 = vlaneseq
        %v2532 = vshrl.u32 %v2531, 7
        %v2533 = vsub.s32 %v2530, %v2532
        %v2534 = vrot.slane %v2526, %v2533
        %v2536 = vunpack.c.l.s4 1934713408
        %v2537 = vunpack.c.0.s8 %v2536
        %v2538 = vlaneseq
        %v2539 = vshrl.u32 %v2538, 7
        %v2540 = vsub.s32 %v2537, %v2539
        %v2541 = vrot.slane %v2527, %v2540
        %v2542 = vcombine.low %v2486, %v2518
        %v2543 = vcombine.high %v2486, %v2518
        %v2544 = vcombine.low %v2493, %v2525
        %v2545 = vcombine.high %v2493, %v2525
        %v2546 = vcombine.low %v2502, %v2534
        %v2547 = vcombine.high %v2502, %v2534
        %v2548 = vcombine.low %v2509, %v2541
        %v2549 = vcombine.high %v2509, %v2541
        %v2550 = vcombine.low %v1636, %v1644
        %v2551 = vcombine.high %v1636, %v1644
        %v2553 = vunpack.c.l.s4 1983009808
        %v2554 = vunpack.c.0.s8 %v2553
        %v2555 = vlaneseq
        %v2556 = vshrl.u32 %v2555, 7
        %v2557 = vsub.s32 %v2554, %v2556
        %v2558 = vrot.slane %v2550, %v2557
        %v2560 = vunpack.c.l.s4 1983009808
        %v2561 = vunpack.c.0.s8 %v2560
        %v2562 = vlaneseq
        %v2563 = vshrl.u32 %v2562, 7
        %v2564 = vsub.s32 %v2561, %v2563
        %v2565 = vrot.slane %v2551, %v2564
        %v2566 = vcombine.high %v1640, 0.0
        %v2568 = vunpack.c.l.s4 1983009808
        %v2569 = vunpack.c.0.s8 %v2568
        %v2570 = vlaneseq
        %v2571 = vshrl.u32 %v2570, 7
        %v2572 = vsub.s32 %v2569, %v2571
        %v2573 = vrot.slane %v1640, %v2572
        %v2575 = vunpack.c.l.s4 1983009808
        %v2576 = vunpack.c.0.s8 %v2575
        %v2577 = vlaneseq
        %v2578 = vshrl.u32 %v2577, 7
        %v2579 = vsub.s32 %v2576, %v2578
        %v2580 = vrot.slane %v2566, %v2579
        %v2581 = vcombine.low %v2558, %v2573
        %v2582 = vcombine.high %v2558, %v2573
        %v2584 = vunpack.c.l.s4 1934713408
        %v2585 = vunpack.c.0.s8 %v2584
        %v2586 = vlaneseq
        %v2587 = vshrl.u32 %v2586, 7
        %v2588 = vsub.s32 %v2585, %v2587
        %v2589 = vrot.slane %v2581, %v2588
        %v2591 = vunpack.c.l.s4 1934713408
        %v2592 = vunpack.c.0.s8 %v2591
        %v2593 = vlaneseq
        %v2594 = vshrl.u32 %v2593, 7
        %v2595 = vsub.s32 %v2592, %v2594
        %v2596 = vrot.slane %v2582, %v2595
        %v2597 = vcombine.low %v2565, %v2580
        %v2598 = vcombine.high %v2565, %v2580
        %v2600 = vunpack.c.l.s4 1934713408
        %v2601 = vunpack.c.0.s8 %v2600
        %v2602 = vlaneseq
        %v2603 = vshrl.u32 %v2602, 7
        %v2604 = vsub.s32 %v2601, %v2603
        %v2605 = vrot.slane %v2597, %v2604
        %v2607 = vunpack.c.l.s4 1934713408
        %v2608 = vunpack.c.0.s8 %v2607
        %v2609 = vlaneseq
        %v2610 = vshrl.u32 %v2609, 7
        %v2611 = vsub.s32 %v2608, %v2610
        %v2612 = vrot.slane %v2598, %v2611
        %v2613 = vcombine.high %v2589, 0.0
        %v2614 = vcombine.high %v2596, 0.0
        %v2615 = vcombine.high %v2605, 0.0
        %v2616 = vcombine.high %v2612, 0.0
        %2621 = vrot.lane.b32.xlu0 %v1796, 16
        %v2622 = vpop.permute.xlu0 %2621
        %2623 = vrot.lane.b32.xlu0 %v1932, 16
        %v2624 = vpop.permute.xlu0 %2623
        %2625 = vrot.lane.b32.xlu0 %v2068, 16
        %v2626 = vpop.permute.xlu0 %2625
        %2627 = vrot.lane.b32.xlu0 %v2138, 16
        %v2628 = vpop.permute.xlu0 %2627
        %2637 = vrot.lane.b32.xlu0 %v1797, 32
        %v2638 = vpop.permute.xlu0 %2637
        %2639 = vrot.lane.b32.xlu0 %v1933, 32
        %v2640 = vpop.permute.xlu0 %2639
        %2641 = vrot.lane.b32.xlu0 %v2069, 32
        %v2642 = vpop.permute.xlu0 %2641
        %2643 = vrot.lane.b32.xlu0 %v2121, 32
        %v2644 = vpop.permute.xlu0 %2643
        %2653 = vrot.lane.b32.xlu0 %v1798, 48
        %v2654 = vpop.permute.xlu0 %2653
        %2655 = vrot.lane.b32.xlu0 %v1934, 48
        %v2656 = vpop.permute.xlu0 %2655
        %2657 = vrot.lane.b32.xlu0 %v2070, 48
        %v2658 = vpop.permute.xlu0 %2657
        %2659 = vrot.lane.b32.xlu0 %v2139, 48
        %v2660 = vpop.permute.xlu0 %2659
        %2669 = vrot.lane.b32.xlu0 %v1799, 64
        %v2670 = vpop.permute.xlu0 %2669
        %2671 = vrot.lane.b32.xlu0 %v1935, 64
        %v2672 = vpop.permute.xlu0 %2671
        %2673 = vrot.lane.b32.xlu0 %v2071, 64
        %v2674 = vpop.permute.xlu0 %2673
        %2675 = vrot.lane.b32.xlu0 %v2130, 64
        %v2676 = vpop.permute.xlu0 %2675
        %2685 = vrot.lane.b32.xlu0 %v1800, 80
        %v2686 = vpop.permute.xlu0 %2685
        %2687 = vrot.lane.b32.xlu0 %v1936, 80
        %v2688 = vpop.permute.xlu0 %2687
        %2689 = vrot.lane.b32.xlu0 %v2072, 80
        %v2690 = vpop.permute.xlu0 %2689
        %2691 = vrot.lane.b32.xlu0 %v2140, 80
        %v2692 = vpop.permute.xlu0 %2691
        %2701 = vrot.lane.b32.xlu0 %v1801, 96
        %v2702 = vpop.permute.xlu0 %2701
        %2703 = vrot.lane.b32.xlu0 %v1937, 96
        %v2704 = vpop.permute.xlu0 %2703
        %2705 = vrot.lane.b32.xlu0 %v2073, 96
        %v2706 = vpop.permute.xlu0 %2705
        %2707 = vrot.lane.b32.xlu0 %v2137, 96
        %v2708 = vpop.permute.xlu0 %2707
        %2717 = vrot.lane.b32.xlu0 %v1802, 112
        %v2718 = vpop.permute.xlu0 %2717
        %2719 = vrot.lane.b32.xlu0 %v1938, 112
        %v2720 = vpop.permute.xlu0 %2719
        %2721 = vrot.lane.b32.xlu0 %v2074, 112
        %v2722 = vpop.permute.xlu0 %2721
        %2723 = vrot.lane.b32.xlu0 %v2141, 112
        %v2724 = vpop.permute.xlu0 %2723
        %2733 = vrot.lane.b32.xlu0 %v2271, 16
        %v2734 = vpop.permute.xlu0 %2733
        %2735 = vrot.lane.b32.xlu0 %v2407, 16
        %v2736 = vpop.permute.xlu0 %2735
        %2737 = vrot.lane.b32.xlu0 %v2543, 16
        %v2738 = vpop.permute.xlu0 %2737
        %2739 = vrot.lane.b32.xlu0 %v2613, 16
        %v2740 = vpop.permute.xlu0 %2739
        %2749 = vrot.lane.b32.xlu0 %v2272, 32
        %v2750 = vpop.permute.xlu0 %2749
        %2751 = vrot.lane.b32.xlu0 %v2408, 32
        %v2752 = vpop.permute.xlu0 %2751
        %2753 = vrot.lane.b32.xlu0 %v2544, 32
        %v2754 = vpop.permute.xlu0 %2753
        %2755 = vrot.lane.b32.xlu0 %v2596, 32
        %v2756 = vpop.permute.xlu0 %2755
        %2765 = vrot.lane.b32.xlu0 %v2273, 48
        %v2766 = vpop.permute.xlu0 %2765
        %2767 = vrot.lane.b32.xlu0 %v2409, 48
        %v2768 = vpop.permute.xlu0 %2767
        %2769 = vrot.lane.b32.xlu0 %v2545, 48
        %v2770 = vpop.permute.xlu0 %2769
        %2771 = vrot.lane.b32.xlu0 %v2614, 48
        %v2772 = vpop.permute.xlu0 %2771
        %2781 = vrot.lane.b32.xlu0 %v2274, 64
        %v2782 = vpop.permute.xlu0 %2781
        %2783 = vrot.lane.b32.xlu0 %v2410, 64
        %v2784 = vpop.permute.xlu0 %2783
        %2785 = vrot.lane.b32.xlu0 %v2546, 64
        %v2786 = vpop.permute.xlu0 %2785
        %2787 = vrot.lane.b32.xlu0 %v2605, 64
        %v2788 = vpop.permute.xlu0 %2787
        %2797 = vrot.lane.b32.xlu0 %v2275, 80
        %v2798 = vpop.permute.xlu0 %2797
        %2799 = vrot.lane.b32.xlu0 %v2411, 80
        %v2800 = vpop.permute.xlu0 %2799
        %2801 = vrot.lane.b32.xlu0 %v2547, 80
        %v2802 = vpop.permute.xlu0 %2801
        %2803 = vrot.lane.b32.xlu0 %v2615, 80
        %v2804 = vpop.permute.xlu0 %2803
        %2813 = vrot.lane.b32.xlu0 %v2276, 96
        %v2814 = vpop.permute.xlu0 %2813
        %2815 = vrot.lane.b32.xlu0 %v2412, 96
        %v2816 = vpop.permute.xlu0 %2815
        %2817 = vrot.lane.b32.xlu0 %v2548, 96
        %v2818 = vpop.permute.xlu0 %2817
        %2819 = vrot.lane.b32.xlu0 %v2612, 96
        %v2820 = vpop.permute.xlu0 %2819
        %2829 = vrot.lane.b32.xlu0 %v2277, 112
        %v2830 = vpop.permute.xlu0 %2829
        %2831 = vrot.lane.b32.xlu0 %v2413, 112
        %v2832 = vpop.permute.xlu0 %2831
        %2833 = vrot.lane.b32.xlu0 %v2549, 112
        %v2834 = vpop.permute.xlu0 %2833
        %2835 = vrot.lane.b32.xlu0 %v2616, 112
        %v2836 = vpop.permute.xlu0 %2835
        %vm2841 = vcmask 130048
        %v2842 = vsel %vm2841, %v1795, %v2622
        %v2843 = vsel %vm2841, %v1931, %v2624
        %v2844 = vsel %vm2841, %v2067, %v2626
        %v2845 = vsel %vm2841, %v2114, %v2628
        %vm2846 = vcmask 261120
        %v2847 = vsel %vm2846, %v2842, %v2638
        %v2848 = vsel %vm2846, %v2843, %v2640
        %v2849 = vsel %vm2846, %v2844, %v2642
        %v2850 = vsel %vm2846, %v2845, %v2644
        %vm2851 = vcmask 392192
        %v2852 = vsel %vm2851, %v2847, %v2654
        %v2853 = vsel %vm2851, %v2848, %v2656
        %v2854 = vsel %vm2851, %v2849, %v2658
        %v2855 = vsel %vm2851, %v2850, %v2660
        %vm2856 = vcmask 523264
        %v2857 = vsel %vm2856, %v2852, %v2670
        %v2858 = vsel %vm2856, %v2853, %v2672
        %v2859 = vsel %vm2856, %v2854, %v2674
        %v2860 = vsel %vm2856, %v2855, %v2676
        %vm2861 = vcmask 654336
        %v2862 = vsel %vm2861, %v2857, %v2686
        %v2863 = vsel %vm2861, %v2858, %v2688
        %v2864 = vsel %vm2861, %v2859, %v2690
        %v2865 = vsel %vm2861, %v2860, %v2692
        %vm2866 = vcmask 785408
        %v2867 = vsel %vm2866, %v2862, %v2702
        %v2868 = vsel %vm2866, %v2863, %v2704
        %v2869 = vsel %vm2866, %v2864, %v2706
        %v2870 = vsel %vm2866, %v2865, %v2708
        %vm2871 = vcmask 916480
        %v2872 = vsel %vm2871, %v2867, %v2718
        %v2873 = vsel %vm2871, %v2868, %v2720
        %v2874 = vsel %vm2871, %v2869, %v2722
        %v2875 = vsel %vm2871, %v2870, %v2724
        %v2876 = vsel %vm2841, %v2270, %v2734
        %v2877 = vsel %vm2841, %v2406, %v2736
        %v2878 = vsel %vm2841, %v2542, %v2738
        %v2879 = vsel %vm2841, %v2589, %v2740
        %v2880 = vsel %vm2846, %v2876, %v2750
        %v2881 = vsel %vm2846, %v2877, %v2752
        %v2882 = vsel %vm2846, %v2878, %v2754
        %v2883 = vsel %vm2846, %v2879, %v2756
        %v2884 = vsel %vm2851, %v2880, %v2766
        %v2885 = vsel %vm2851, %v2881, %v2768
        %v2886 = vsel %vm2851, %v2882, %v2770
        %v2887 = vsel %vm2851, %v2883, %v2772
        %v2888 = vsel %vm2856, %v2884, %v2782
        %v2889 = vsel %vm2856, %v2885, %v2784
        %v2890 = vsel %vm2856, %v2886, %v2786
        %v2891 = vsel %vm2856, %v2887, %v2788
        %v2892 = vsel %vm2861, %v2888, %v2798
        %v2893 = vsel %vm2861, %v2889, %v2800
        %v2894 = vsel %vm2861, %v2890, %v2802
        %v2895 = vsel %vm2861, %v2891, %v2804
        %v2896 = vsel %vm2866, %v2892, %v2814
        %v2897 = vsel %vm2866, %v2893, %v2816
        %v2898 = vsel %vm2866, %v2894, %v2818
        %v2899 = vsel %vm2866, %v2895, %v2820
        %v2900 = vsel %vm2871, %v2896, %v2830
        %v2901 = vsel %vm2871, %v2897, %v2832
        %v2902 = vsel %vm2871, %v2898, %v2834
        %v2903 = vsel %vm2871, %v2899, %v2836
        %v2904 = vld [vmem:[%s2] sm:$0xff]
        %v2905 = vld [vmem:[%s3] sm:$0xff]
        %2907 = vset.pattern.permute.xlu0 0
        %2908 = vperm.xlu0 %2907, %v2905
        %v2909 = vpop.permute.xlu0 %2908
        %vm2911 = vcmask 220160
        %v2913 = vsel %vm2911, %v2904, 0
        %vm2915 = vcmask 1042432
        %v2917 = vsel %vm2915, %v2875, 0
        %v2920 = vsel %vm2915, %v2903, 0
        %2922 = vmatprep.subr.mxu0 0.0
        %2923 = vmatpush1.msra.mxu0 0.0
        %2924 = vmatprep.subr.mxu0 0.0
        %2925 = vmatpush1.msra.mxu0 0.0
        %2926 = vmatprep.subr.mxu0 0.0
        %2927 = vmatpush1.msra.mxu0 0.0
        %2928 = vmatprep.subr.mxu0 0.0
        %2929 = vmatpush1.msra.mxu0 0.0
        %2930 = vmatprep.subr.mxu0 0.0
        %2931 = vmatpush1.msra.mxu0 0.0
        %2932 = vmatprep.subr.mxu0 0.0
        %2933 = vmatpush1.msra.mxu0 0.0
        %2934 = vmatprep.subr.mxu0 0.0
        %2935 = vmatpush1.msra.mxu0 0.0
        %2936 = vmatprep.subr.mxu0 0.0
        %2937 = vmatpush1.msra.mxu0 0.0
        %2938 = vmatprep.subr.mxu0 0.0
        %2939 = vmatpush1.msra.mxu0 0.0
        %2940 = vmatprep.subr.mxu0 0.0
        %2941 = vmatpush1.msra.mxu0 0.0
        %2942 = vmatprep.subr.mxu0 0.0
        %2943 = vmatpush1.msra.mxu0 0.0
        %2944 = vmatprep.subr.mxu0 0.0
        %2945 = vmatpush1.msra.mxu0 0.0
        %2946 = vmatprep.subr.mxu0 %v2920
        %2947 = vmatpush1.msra.mxu0 %v2917
        %2948 = vmatprep.subr.mxu0 %v2902
        %2949 = vmatpush1.msra.mxu0 %v2874
        %2950 = vmatprep.subr.mxu0 %v2901
        %2951 = vmatpush1.msra.mxu0 %v2873
        %2952 = vmatprep.subr.mxu0 %v2900
        %2953 = vmatpush1.msra.mxu0 %v2872
        %2954 = vmatprep.subr.mxu0 0.0
        %2955 = vmatpush2.msra.mxu0 0.0
        %2956 = vmatprep.subr.mxu0 0.0
        %2957 = vmatpush2.msra.mxu0 0.0
        %2958 = vmatprep.subr.mxu0 0.0
        %2959 = vmatpush2.msra.mxu0 0.0
        %2960 = vmatprep.subr.mxu0 0.0
        %2961 = vmatpush2.msra.mxu0 0.0
        %2962 = vmatprep.subr.mxu0 0.0
        %2963 = vmatpush2.msra.mxu0 0.0
        %2964 = vmatprep.subr.mxu0 0.0
        %2965 = vmatpush2.msra.mxu0 0.0
        %2966 = vmatprep.subr.mxu0 0.0
        %2967 = vmatpush2.msra.mxu0 0.0
        %2968 = vmatprep.subr.mxu0 0.0
        %2969 = vmatpush2.msra.mxu0 0.0
        %2970 = vmatprep.subr.mxu0 0.0
        %2971 = vmatpush2.msra.mxu0 0.0
        %2972 = vmatprep.subr.mxu0 0.0
        %2973 = vmatpush2.msra.mxu0 0.0
        %2974 = vmatprep.subr.mxu0 0.0
        %2975 = vmatpush2.msra.mxu0 0.0
        %2976 = vmatprep.subr.mxu0 0.0
        %2977 = vmatpush2.msra.mxu0 0.0
        %2978 = vmatprep.subr.mxu0 0.0
        %2979 = vmatpush2.msra.mxu0 0.0
        %2980 = vmatprep.subr.mxu0 0.0
        %2981 = vmatpush2.msra.mxu0 0.0
        %2982 = vmatprep.subr.mxu0 0.0
        %2983 = vmatpush2.msra.mxu0 0.0
        %2984 = vmatprep.subr.mxu0 0.0
        %2985 = vmatpush2.msra.mxu0 0.0
        %2986 = vmatprep.mubr.f32.mxu0 0.0
        %2987 = vmatmul.mubr.f32.gmra.mxu0 %v2913
        %v2988 = vpop.f32.mrf.mxu0
        %v2989 = vadd.f32 %v2909, %v2988
        %v2990 = vpop.f32.mrf.mxu0
        %v2991 = vadd.f32 %v2909, %v2990
        %2992 = vdwg.mxu0
        %2993 = vst [vmem:[%s163] sm:$0xff] %v2989
        %2994 = vst [vmem:[%s163 + $0x8] sm:$0xff] %v2991
        %s2995 = sand.u32 %s103, 1
        %s2996 = scalar_lea.sflag [#allocation5], %s2995
        %s2997 = sand.u32 %s103, 1
        %s2998 = smul.addr %s2997, 16
        %s2999 = scalar_lea.vmem [#allocation4], %s2998
        // Predicated region
        $region115: #{tpu_custom_call.1} parent=31 // pred_check
          %p3000 = pneg %p113
        $region116: #{tpu_custom_call.1} parent=31 // pred_check_branch
          %3002 = sbr.rel (%p3000) target = $region118
        $region117: #{tpu_custom_call.1} parent=31 // pred_region
          %s3003 = smul.u32 2, %s23
          %s3005 = ssub.s32 256, 256
          %3006 = vsyncadd %s2996, %s3005
          %s3007 = smul.addr %s22, 2
          %s3008 = sadd.s32 %s3003, %s3007
          %s3009 = smul.addr %s3008, 128
          %s3010 = scalar_lea.hbm %s4, %s3009
          %s3012 = sshll.u32 %s2999, 4
          %s3013 = int_to_ptr.vmem [resolvable:$true] %s3012
          %3015 = dma.vmem_to_hbm [thread:$0]  %s3013, 256, %s3010, %s2996
        $region118: #{tpu_custom_call.1} parent=31 // pred_fallthru
          _
      $region32: #{tpu_custom_call.1} parent=5 // pred_fallthru
        _
      %p3016 = scmp.le.s32.totalorder 2, %s13
      // Predicated region
      $region119: #{tpu_custom_call.1} parent=5 // pred_check
        %p3017 = pneg %p3016
      $region120: #{tpu_custom_call.1} parent=5 // pred_check_branch
        %3019 = sbr.rel (%p3017) target = $region122
      $region121: #{tpu_custom_call.1} parent=5 // pred_region
        %s3020 = ssub.s32 %s13, 2
        // Predicated region
        $region123: #{tpu_custom_call.1} parent=121 // pred_check
          %p3021 = pneg %p119
        $region124: #{tpu_custom_call.1} parent=121 // pred_check_branch
          %3023 = sbr.rel (%p3021) target = $region126
        $region125: #{tpu_custom_call.1} parent=121 // pred_region
          %s3024 = sand.u32 %s104, 1
          %s3025 = scalar_lea.sflag [#allocation5], %s3024
          %s3026 = sand.u32 %s104, 1
          %s3027 = smul.addr %s3026, 16
          %s3028 = scalar_lea.vmem [#allocation4], %s3027
          %3029 = dma.done %s3025, 256
        $region126: #{tpu_custom_call.1} parent=121 // pred_fallthru
          _
      $region122: #{tpu_custom_call.1} parent=5 // pred_fallthru
        _
    $region6: #{tpu_custom_call.1} parent=1 // loop_footer
      %s17 = sadd.s32 1, %s13
    $region7: #{tpu_custom_call.1} parent=1 // loop_footer_branch
      %12 = sbr.rel target = $region3
    $region8: #{tpu_custom_call.1} parent=1 // loop_exit
      _
    %3030 = vsyncpa [#allocation5], 1
    %s3031 = scalar_lea.sflag [#allocation5], 1
    %3032 = vsyncpa %s3031, 1
  %3033 = vsyncmov [#allocation3]
  %s3034 = vpop.sfrf %3033
  %p3035 = scmp.eq.s32.totalorder %s3034, 0
  %p3036 = pneg %p3035
  %3038 = shalt.err (%p3036)
  %s3039 = scalar_lea.sflag [#allocation3], 1
  %3040 = vsyncmov %s3039
  %s3041 = vpop.sfrf %3040
  %p3042 = scmp.eq.s32.totalorder %s3041, 0
  %p3043 = pneg %p3042
  %3045 = shalt.err (%p3043)

</llo_original>
